<compile_context>
chip_gen: v7x
topology: tpu7x:2x2x1
jax: 0.10.0
libtpu: 0.0.40
codegen_flags: <defaults>
</compile_context>

<pallas_src>
import math

import jax
import jax.numpy as jnp
from jax.experimental import pallas as pl
from jax.experimental.pallas import tpu as pltpu


def _embed_kernel(tok_tile, vocab_pad):
    def kernel(tok_ref, table_ref, out_ref):
        # tok_ref:   (tok_tile, 1)     int32  (VMEM, blocked per grid step)
        # table_ref: (vocab_pad, emb)  f32    (VMEM, single resident copy)
        # out_ref:   (tok_tile, emb)   f32
        tok = tok_ref[...]  # (tok_tile, 1)
        lane_ids = jax.lax.broadcasted_iota(jnp.int32, (tok_tile, vocab_pad), 1)
        # sqrt(emb) is already folded into the prepared table, so the one-hot
        # is plain 0/1 and there is no separate (tok_tile, emb) multiply pass.
        one_hot = jnp.where(lane_ids == tok, 1.0, 0.0).astype(table_ref.dtype)
        out_ref[...] = jnp.dot(
            one_hot, table_ref[...], preferred_element_type=jnp.float32
        ).astype(out_ref.dtype)

    return kernel


def prepare_midi_embedding_table(emb_table, emb_size):
    """Build the kernel-side table ONCE at module init (NOT per forward call).

    Pads vocab up to a 128-multiple and folds the sqrt(emb_size) scale into
    the weights in full f32, so the forward kernel is a pure one-hot gather
    and matches the PyTorch `embedding(tokens) * sqrt(emb)` exactly.
    """
    vocab, emb = emb_table.shape
    assert emb == emb_size
    vocab_pad = ((vocab + 127) // 128) * 128
    scale = jnp.asarray(math.sqrt(emb_size), emb_table.dtype)
    table = jnp.zeros((vocab_pad, emb), emb_table.dtype)
    table = table.at[:vocab, :].set(emb_table * scale)
    return table


def midi_token_embedding(tokens, table_padded, *, tok_tile=1024):
    """tokens: (batch, seq) int; table_padded: output of prepare_midi_embedding_table.
    Returns (seq, batch, emb) f32, matching the PyTorch module forward."""
    batch, seq = tokens.shape
    vocab_pad, emb = table_padded.shape
    assert tok_tile % 8 == 0
    # Note: emb that is a multiple of 128 gives unmasked lane-dense stores.

    # permute (batch, seq) -> (seq, batch), then flatten the token stream.
    tokens_flat = jnp.transpose(tokens, (1, 0)).reshape(-1).astype(jnp.int32)
    n_tok = tokens_flat.shape[0]

    n_tiles = pl.cdiv(n_tok, tok_tile)
    n_tok_pad = n_tiles * tok_tile
    tokens_padded = (
        jnp.zeros((n_tok_pad, 1), jnp.int32).at[:n_tok, 0].set(tokens_flat)
    )

    itemsize = jnp.dtype(table_padded.dtype).itemsize
    cost = pl.CostEstimate(
        flops=2 * n_tok_pad * vocab_pad * emb,
        transcendentals=0,
        bytes_accessed=(
            n_tok_pad * emb * itemsize   # output write
            + vocab_pad * emb * itemsize  # table read (once)
            + n_tok_pad * 4               # token read
        ),
    )

    # Explicit VMEM budget: double-buffered token + output blocks, the single
    # resident table copy, one-hot temporaries, plus headroom.
    vmem_bytes = (
        2 * tok_tile * 128 * 4            # token blocks (lane-padded int32 col)
        + 2 * tok_tile * emb * itemsize   # output blocks
        + vocab_pad * emb * itemsize      # resident table (single copy)
        + 2 * tok_tile * vocab_pad * 4    # one-hot temporaries / spill
    )
    vmem_limit = int(min(64 * 1024 * 1024, vmem_bytes + (16 << 20)))

    grid_spec = pltpu.PrefetchScalarGridSpec(
        num_scalar_prefetch=0,
        grid=(n_tiles,),
        in_specs=[
            # one token tile per grid step (blocked VMEM int32 input)
            pl.BlockSpec((tok_tile, 1), lambda t: (t, 0)),
            # whole (padded, pre-scaled) table: one VMEM-resident copy,
            # no per-step pipelining / no redundant second buffer.
            pl.BlockSpec(memory_space=pltpu.MemorySpace.VMEM),
        ],
        out_specs=pl.BlockSpec((tok_tile, emb), lambda t: (t, 0)),
    )

    out_flat = pl.pallas_call(
        _embed_kernel(tok_tile, vocab_pad),
        grid_spec=grid_spec,
        out_shape=jax.ShapeDtypeStruct((n_tok_pad, emb), table_padded.dtype),
        compiler_params=pltpu.CompilerParams(
            dimension_semantics=("parallel",),
            vmem_limit_bytes=vmem_limit,
        ),
        cost_estimate=cost,
    )(tokens_padded, table_padded)

    return out_flat[:n_tok].reshape(seq, batch, emb)


def _reference(tokens, emb_table, emb_size):
    return jnp.take(emb_table, jnp.transpose(tokens, (1, 0)), axis=0) * math.sqrt(
        emb_size
    )


if __name__ == "__main__":
    key = jax.random.PRNGKey(0)
    k_emb, k_tok, k_tok2 = jax.random.split(key, 3)

    # Small, forward-consistent shapes (nn.Embedding weight ~ N(0,1)).
    batch, seq = 2, 8
    vocab_size, emb_size = 64, 128
    emb_table = jax.random.normal(k_emb, (vocab_size, emb_size), dtype=jnp.float32)

    # One-time (init-time) table preparation: pad vocab to 128, fold sqrt(emb).
    table_padded = prepare_midi_embedding_table(emb_table, emb_size)

    tokens = jax.random.randint(k_tok, (batch, seq), 0, vocab_size, dtype=jnp.int32)
    out = jax.block_until_ready(midi_token_embedding(tokens, table_padded))
    ref = _reference(tokens, emb_table, emb_size)
    assert out.shape == (seq, batch, emb_size)
    assert jnp.allclose(out, ref, atol=1e-5, rtol=1e-5)

    # Second check: tail tile + multi-step grid (n_tok=300, tok_tile=256 -> 2 tiles).
    batch2, seq2 = 3, 100
    tokens2 = jax.random.randint(k_tok2, (batch2, seq2), 0, vocab_size, dtype=jnp.int32)
    out2 = jax.block_until_ready(
        midi_token_embedding(tokens2, table_padded, tok_tile=256)
    )
    ref2 = _reference(tokens2, emb_table, emb_size)
    assert out2.shape == (seq2, batch2, emb_size)
    assert jnp.allclose(out2, ref2, atol=1e-5, rtol=1e-5)

    print("KERNEL_OK")
</pallas_src>

<mosaic_0001>
module attributes {stable_mosaic.version = 11 : i64} {
  func.func @kernel(%arg0: i32, %arg1: memref<1024x1xi32, #tpu.memory_space<vmem>>, %arg2: memref<128x128xf32, #tpu.memory_space<vmem>>, %arg3: memref<1024x128xf32, #tpu.memory_space<vmem>>) attributes {dimension_semantics = [#tpu.dimension_semantics<parallel>], iteration_bounds = array<i64: 1>, scalar_prefetch = 0 : i64, scratch_operands = 0 : i64, tpu.core_type = #tpu.core_type<tc>, window_params = [{transform_indices = @transform_0, window_bounds = array<i64: 1024, 1>}, {pipeline_mode = #tpu.pipeline_mode<synchronous>, transform_indices = @transform_1, window_bounds = array<i64: 128, 128>}, {transform_indices = @transform_2, window_bounds = array<i64: 1024, 128>}]} {
    %c0 = arith.constant 0 : index
    %c0_0 = arith.constant 0 : index
    %0 = vector.load %arg1[%c0, %c0_0] : memref<1024x1xi32, #tpu.memory_space<vmem>>, vector<1024x1xi32>
    %1 = tpu.iota {dimensions = array<i32: 1>} : vector<1024x128xi32>
    %2 = vector.broadcast %0 : vector<1024x1xi32> to vector<1024x128xi32>
    %3 = arith.cmpi eq, %1, %2 : vector<1024x128xi32>
    %cst = arith.constant 1.000000e+00 : f32
    %cst_1 = arith.constant 0.000000e+00 : f32
    %4 = vector.broadcast %cst : f32 to vector<1024x128xf32>
    %5 = vector.broadcast %cst_1 : f32 to vector<1024x128xf32>
    %6 = arith.select %3, %4, %5 : vector<1024x128xi1>, vector<1024x128xf32>
    %c0_2 = arith.constant 0 : index
    %c0_3 = arith.constant 0 : index
    %7 = vector.load %arg2[%c0_2, %c0_3] : memref<128x128xf32, #tpu.memory_space<vmem>>, vector<128x128xf32>
    %cst_4 = arith.constant dense<0.000000e+00> : vector<1024x128xf32>
    %8 = tpu.matmul %6, %7, %cst_4 {dimension_numbers = #tpu.dot_dimension_numbers<[1], [0], [0], [1], [0, 0, 1, 1], [], []>} : vector<1024x128xf32>, vector<128x128xf32>, vector<1024x128xf32> -> vector<1024x128xf32>
    %c0_5 = arith.constant 0 : index
    %c0_6 = arith.constant 0 : index
    %9 = vector.load %arg3[%c0_5, %c0_6] : memref<1024x128xf32, #tpu.memory_space<vmem>>, vector<1024x128xf32>
    tpu.vector_store %arg3[%c0_5, %c0_6], %8 {strides = array<i32>} : memref<1024x128xf32, #tpu.memory_space<vmem>>, vector<1024x128xf32>,
    return
  }
  func.func @transform_0(%arg0: i32) -> (i32, i32) {
    %c0_i32 = arith.constant 0 : i32
    %c0_i32_0 = arith.constant 0 : i32
    return %arg0, %c0_i32 : i32, i32
  }
  func.func @transform_1(%arg0: i32) -> (i32, i32) {
    %c0_i32 = arith.constant 0 : i32
    %c0_i32_0 = arith.constant 0 : i32
    %c0_i32_1 = arith.constant 0 : i32
    return %c0_i32, %c0_i32_0 : i32, i32
  }
  func.func @transform_2(%arg0: i32) -> (i32, i32) {
    %c0_i32 = arith.constant 0 : i32
    %c0_i32_0 = arith.constant 0 : i32
    return %arg0, %c0_i32 : i32, i32
  }
}

</mosaic_0001>

<llo_original>
// kernel: tpu_custom_call.1
$region0: #{tpu_custom_call.1}
  #allocation0 [shape = 'u32[]', space=smem, size = 0x4, offset = 0x4, fixed_abs, tag = 'smem constant byte address 0x4 - core index']
  #allocation1 [shape = 'u32[144,128]{1,0:T(1,128)}', space=vmem, size = 0x12000, scoped, tag = 'internal scratch']
  %s0 = inlined_call_operand.vmem [shape: s32[1024,1], index: 0, kind: input, shape index: {}]
  %s1 = inlined_call_operand.vmem [shape: f32[128,128], index: 1, kind: input, shape index: {}]
  %s2 = inlined_call_operand.hbm [shape: f32[1024,128], index: 2, kind: output, shape index: {}]
  %s3 = sld [smem:[#allocation0]]
  $region18: #{tpu_custom_call.1} parent=0
    _
  %s5 = ssub.s32 1, %s3
  %s6 = scalar_select 0, %s5, %s3
  $region1: #{tpu_custom_call.1} parent=0
    #allocation2 [shape = 'u8[524288]{0}', space=vmem, size = 0x80000, scoped, tag = 'output window, operand 0, single buffered']
    #allocation3 [shape = 's32[1]{0}', space=sflag, size = 0x4, scoped, tag = 'scoped memory for tpu_custom_call.1']
    %7 = vsyncpa [#allocation3], 0
    // Predicated region
    $region2: #{tpu_custom_call.1} parent=1 // pred_check
      _
    $region3: #{tpu_custom_call.1} parent=1 // pred_check_branch
      %9 = sbr.rel (0) target = $region5
    $region4: #{tpu_custom_call.1} parent=1 // pred_region
      _
    $region5: #{tpu_custom_call.1} parent=1 // pred_fallthru
      _
    // Predicated region
    $region6: #{tpu_custom_call.1} parent=1 // pred_check
      _
    $region7: #{tpu_custom_call.1} parent=1 // pred_check_branch
      %11 = sbr.rel (0) target = $region9
    $region8: #{tpu_custom_call.1} parent=1 // pred_region
      _
    $region9: #{tpu_custom_call.1} parent=1 // pred_fallthru
      _
    %v12 = vld [vmem:[%s0] sm:$0xff]
    %v13 = vld [vmem:[%s0 + $0x8] sm:$0xff]
    %v14 = vld [vmem:[%s0 + $0x10] sm:$0xff]
    %v15 = vld [vmem:[%s0 + $0x18] sm:$0xff]
    %v16 = vld [vmem:[%s0 + $0x20] sm:$0xff]
    %v17 = vld [vmem:[%s0 + $0x28] sm:$0xff]
    %v18 = vld [vmem:[%s0 + $0x30] sm:$0xff]
    %v19 = vld [vmem:[%s0 + $0x38] sm:$0xff]
    %v20 = vld [vmem:[%s0 + $0x40] sm:$0xff]
    %v21 = vld [vmem:[%s0 + $0x48] sm:$0xff]
    %v22 = vld [vmem:[%s0 + $0x50] sm:$0xff]
    %v23 = vld [vmem:[%s0 + $0x58] sm:$0xff]
    %v24 = vld [vmem:[%s0 + $0x60] sm:$0xff]
    %v25 = vld [vmem:[%s0 + $0x68] sm:$0xff]
    %v26 = vld [vmem:[%s0 + $0x70] sm:$0xff]
    %v27 = vld [vmem:[%s0 + $0x78] sm:$0xff]
    %v28 = vld [vmem:[%s0 + $0x80] sm:$0xff]
    %v29 = vld [vmem:[%s0 + $0x88] sm:$0xff]
    %v30 = vld [vmem:[%s0 + $0x90] sm:$0xff]
    %v31 = vld [vmem:[%s0 + $0x98] sm:$0xff]
    %v32 = vld [vmem:[%s0 + $0xa0] sm:$0xff]
    %v33 = vld [vmem:[%s0 + $0xa8] sm:$0xff]
    %v34 = vld [vmem:[%s0 + $0xb0] sm:$0xff]
    %v35 = vld [vmem:[%s0 + $0xb8] sm:$0xff]
    %v36 = vld [vmem:[%s0 + $0xc0] sm:$0xff]
    %v37 = vld [vmem:[%s0 + $0xc8] sm:$0xff]
    %v38 = vld [vmem:[%s0 + $0xd0] sm:$0xff]
    %v39 = vld [vmem:[%s0 + $0xd8] sm:$0xff]
    %v40 = vld [vmem:[%s0 + $0xe0] sm:$0xff]
    %v41 = vld [vmem:[%s0 + $0xe8] sm:$0xff]
    %v42 = vld [vmem:[%s0 + $0xf0] sm:$0xff]
    %v43 = vld [vmem:[%s0 + $0xf8] sm:$0xff]
    %v44 = vld [vmem:[%s0 + $0x100] sm:$0xff]
    %v45 = vld [vmem:[%s0 + $0x108] sm:$0xff]
    %v46 = vld [vmem:[%s0 + $0x110] sm:$0xff]
    %v47 = vld [vmem:[%s0 + $0x118] sm:$0xff]
    %v48 = vld [vmem:[%s0 + $0x120] sm:$0xff]
    %v49 = vld [vmem:[%s0 + $0x128] sm:$0xff]
    %v50 = vld [vmem:[%s0 + $0x130] sm:$0xff]
    %v51 = vld [vmem:[%s0 + $0x138] sm:$0xff]
    %v52 = vld [vmem:[%s0 + $0x140] sm:$0xff]
    %v53 = vld [vmem:[%s0 + $0x148] sm:$0xff]
    %v54 = vld [vmem:[%s0 + $0x150] sm:$0xff]
    %v55 = vld [vmem:[%s0 + $0x158] sm:$0xff]
    %v56 = vld [vmem:[%s0 + $0x160] sm:$0xff]
    %v57 = vld [vmem:[%s0 + $0x168] sm:$0xff]
    %v58 = vld [vmem:[%s0 + $0x170] sm:$0xff]
    %v59 = vld [vmem:[%s0 + $0x178] sm:$0xff]
    %v60 = vld [vmem:[%s0 + $0x180] sm:$0xff]
    %v61 = vld [vmem:[%s0 + $0x188] sm:$0xff]
    %v62 = vld [vmem:[%s0 + $0x190] sm:$0xff]
    %v63 = vld [vmem:[%s0 + $0x198] sm:$0xff]
    %v64 = vld [vmem:[%s0 + $0x1a0] sm:$0xff]
    %v65 = vld [vmem:[%s0 + $0x1a8] sm:$0xff]
    %v66 = vld [vmem:[%s0 + $0x1b0] sm:$0xff]
    %v67 = vld [vmem:[%s0 + $0x1b8] sm:$0xff]
    %v68 = vld [vmem:[%s0 + $0x1c0] sm:$0xff]
    %v69 = vld [vmem:[%s0 + $0x1c8] sm:$0xff]
    %v70 = vld [vmem:[%s0 + $0x1d0] sm:$0xff]
    %v71 = vld [vmem:[%s0 + $0x1d8] sm:$0xff]
    %v72 = vld [vmem:[%s0 + $0x1e0] sm:$0xff]
    %v73 = vld [vmem:[%s0 + $0x1e8] sm:$0xff]
    %v74 = vld [vmem:[%s0 + $0x1f0] sm:$0xff]
    %v75 = vld [vmem:[%s0 + $0x1f8] sm:$0xff]
    %v76 = vld [vmem:[%s0 + $0x200] sm:$0xff]
    %v77 = vld [vmem:[%s0 + $0x208] sm:$0xff]
    %v78 = vld [vmem:[%s0 + $0x210] sm:$0xff]
    %v79 = vld [vmem:[%s0 + $0x218] sm:$0xff]
    %v80 = vld [vmem:[%s0 + $0x220] sm:$0xff]
    %v81 = vld [vmem:[%s0 + $0x228] sm:$0xff]
    %v82 = vld [vmem:[%s0 + $0x230] sm:$0xff]
    %v83 = vld [vmem:[%s0 + $0x238] sm:$0xff]
    %v84 = vld [vmem:[%s0 + $0x240] sm:$0xff]
    %v85 = vld [vmem:[%s0 + $0x248] sm:$0xff]
    %v86 = vld [vmem:[%s0 + $0x250] sm:$0xff]
    %v87 = vld [vmem:[%s0 + $0x258] sm:$0xff]
    %v88 = vld [vmem:[%s0 + $0x260] sm:$0xff]
    %v89 = vld [vmem:[%s0 + $0x268] sm:$0xff]
    %v90 = vld [vmem:[%s0 + $0x270] sm:$0xff]
    %v91 = vld [vmem:[%s0 + $0x278] sm:$0xff]
    %v92 = vld [vmem:[%s0 + $0x280] sm:$0xff]
    %v93 = vld [vmem:[%s0 + $0x288] sm:$0xff]
    %v94 = vld [vmem:[%s0 + $0x290] sm:$0xff]
    %v95 = vld [vmem:[%s0 + $0x298] sm:$0xff]
    %v96 = vld [vmem:[%s0 + $0x2a0] sm:$0xff]
    %v97 = vld [vmem:[%s0 + $0x2a8] sm:$0xff]
    %v98 = vld [vmem:[%s0 + $0x2b0] sm:$0xff]
    %v99 = vld [vmem:[%s0 + $0x2b8] sm:$0xff]
    %v100 = vld [vmem:[%s0 + $0x2c0] sm:$0xff]
    %v101 = vld [vmem:[%s0 + $0x2c8] sm:$0xff]
    %v102 = vld [vmem:[%s0 + $0x2d0] sm:$0xff]
    %v103 = vld [vmem:[%s0 + $0x2d8] sm:$0xff]
    %v104 = vld [vmem:[%s0 + $0x2e0] sm:$0xff]
    %v105 = vld [vmem:[%s0 + $0x2e8] sm:$0xff]
    %v106 = vld [vmem:[%s0 + $0x2f0] sm:$0xff]
    %v107 = vld [vmem:[%s0 + $0x2f8] sm:$0xff]
    %v108 = vld [vmem:[%s0 + $0x300] sm:$0xff]
    %v109 = vld [vmem:[%s0 + $0x308] sm:$0xff]
    %v110 = vld [vmem:[%s0 + $0x310] sm:$0xff]
    %v111 = vld [vmem:[%s0 + $0x318] sm:$0xff]
    %v112 = vld [vmem:[%s0 + $0x320] sm:$0xff]
    %v113 = vld [vmem:[%s0 + $0x328] sm:$0xff]
    %v114 = vld [vmem:[%s0 + $0x330] sm:$0xff]
    %v115 = vld [vmem:[%s0 + $0x338] sm:$0xff]
    %v116 = vld [vmem:[%s0 + $0x340] sm:$0xff]
    %v117 = vld [vmem:[%s0 + $0x348] sm:$0xff]
    %v118 = vld [vmem:[%s0 + $0x350] sm:$0xff]
    %v119 = vld [vmem:[%s0 + $0x358] sm:$0xff]
    %v120 = vld [vmem:[%s0 + $0x360] sm:$0xff]
    %v121 = vld [vmem:[%s0 + $0x368] sm:$0xff]
    %v122 = vld [vmem:[%s0 + $0x370] sm:$0xff]
    %v123 = vld [vmem:[%s0 + $0x378] sm:$0xff]
    %v124 = vld [vmem:[%s0 + $0x380] sm:$0xff]
    %v125 = vld [vmem:[%s0 + $0x388] sm:$0xff]
    %v126 = vld [vmem:[%s0 + $0x390] sm:$0xff]
    %v127 = vld [vmem:[%s0 + $0x398] sm:$0xff]
    %v128 = vld [vmem:[%s0 + $0x3a0] sm:$0xff]
    %v129 = vld [vmem:[%s0 + $0x3a8] sm:$0xff]
    %v130 = vld [vmem:[%s0 + $0x3b0] sm:$0xff]
    %v131 = vld [vmem:[%s0 + $0x3b8] sm:$0xff]
    %v132 = vld [vmem:[%s0 + $0x3c0] sm:$0xff]
    %v133 = vld [vmem:[%s0 + $0x3c8] sm:$0xff]
    %v134 = vld [vmem:[%s0 + $0x3d0] sm:$0xff]
    %v135 = vld [vmem:[%s0 + $0x3d8] sm:$0xff]
    %v136 = vld [vmem:[%s0 + $0x3e0] sm:$0xff]
    %v137 = vld [vmem:[%s0 + $0x3e8] sm:$0xff]
    %v138 = vld [vmem:[%s0 + $0x3f0] sm:$0xff]
    %v139 = vld [vmem:[%s0 + $0x3f8] sm:$0xff]
    %v140 = vlaneseq
    %v141 = vand.u32 %v140, 127
    %142 = vset.pattern.permute.xlu0 0
    %143 = vperm.xlu0 %142, %v12
    %v144 = vpop.permute.xlu0 %143
    %145 = vset.pattern.permute.xlu0 0
    %146 = vperm.xlu0 %145, %v13
    %v147 = vpop.permute.xlu0 %146
    %148 = vset.pattern.permute.xlu0 0
    %149 = vperm.xlu0 %148, %v14
    %v150 = vpop.permute.xlu0 %149
    %151 = vset.pattern.permute.xlu0 0
    %152 = vperm.xlu0 %151, %v15
    %v153 = vpop.permute.xlu0 %152
    %154 = vset.pattern.permute.xlu0 0
    %155 = vperm.xlu0 %154, %v16
    %v156 = vpop.permute.xlu0 %155
    %157 = vset.pattern.permute.xlu0 0
    %158 = vperm.xlu0 %157, %v17
    %v159 = vpop.permute.xlu0 %158
    %160 = vset.pattern.permute.xlu0 0
    %161 = vperm.xlu0 %160, %v18
    %v162 = vpop.permute.xlu0 %161
    %163 = vset.pattern.permute.xlu0 0
    %164 = vperm.xlu0 %163, %v19
    %v165 = vpop.permute.xlu0 %164
    %166 = vset.pattern.permute.xlu0 0
    %167 = vperm.xlu0 %166, %v20
    %v168 = vpop.permute.xlu0 %167
    %169 = vset.pattern.permute.xlu0 0
    %170 = vperm.xlu0 %169, %v21
    %v171 = vpop.permute.xlu0 %170
    %172 = vset.pattern.permute.xlu0 0
    %173 = vperm.xlu0 %172, %v22
    %v174 = vpop.permute.xlu0 %173
    %175 = vset.pattern.permute.xlu0 0
    %176 = vperm.xlu0 %175, %v23
    %v177 = vpop.permute.xlu0 %176
    %178 = vset.pattern.permute.xlu0 0
    %179 = vperm.xlu0 %178, %v24
    %v180 = vpop.permute.xlu0 %179
    %181 = vset.pattern.permute.xlu0 0
    %182 = vperm.xlu0 %181, %v25
    %v183 = vpop.permute.xlu0 %182
    %184 = vset.pattern.permute.xlu0 0
    %185 = vperm.xlu0 %184, %v26
    %v186 = vpop.permute.xlu0 %185
    %187 = vset.pattern.permute.xlu0 0
    %188 = vperm.xlu0 %187, %v27
    %v189 = vpop.permute.xlu0 %188
    %190 = vset.pattern.permute.xlu0 0
    %191 = vperm.xlu0 %190, %v28
    %v192 = vpop.permute.xlu0 %191
    %193 = vset.pattern.permute.xlu0 0
    %194 = vperm.xlu0 %193, %v29
    %v195 = vpop.permute.xlu0 %194
    %196 = vset.pattern.permute.xlu0 0
    %197 = vperm.xlu0 %196, %v30
    %v198 = vpop.permute.xlu0 %197
    %199 = vset.pattern.permute.xlu0 0
    %200 = vperm.xlu0 %199, %v31
    %v201 = vpop.permute.xlu0 %200
    %202 = vset.pattern.permute.xlu0 0
    %203 = vperm.xlu0 %202, %v32
    %v204 = vpop.permute.xlu0 %203
    %205 = vset.pattern.permute.xlu0 0
    %206 = vperm.xlu0 %205, %v33
    %v207 = vpop.permute.xlu0 %206
    %208 = vset.pattern.permute.xlu0 0
    %209 = vperm.xlu0 %208, %v34
    %v210 = vpop.permute.xlu0 %209
    %211 = vset.pattern.permute.xlu0 0
    %212 = vperm.xlu0 %211, %v35
    %v213 = vpop.permute.xlu0 %212
    %214 = vset.pattern.permute.xlu0 0
    %215 = vperm.xlu0 %214, %v36
    %v216 = vpop.permute.xlu0 %215
    %217 = vset.pattern.permute.xlu0 0
    %218 = vperm.xlu0 %217, %v37
    %v219 = vpop.permute.xlu0 %218
    %220 = vset.pattern.permute.xlu0 0
    %221 = vperm.xlu0 %220, %v38
    %v222 = vpop.permute.xlu0 %221
    %223 = vset.pattern.permute.xlu0 0
    %224 = vperm.xlu0 %223, %v39
    %v225 = vpop.permute.xlu0 %224
    %226 = vset.pattern.permute.xlu0 0
    %227 = vperm.xlu0 %226, %v40
    %v228 = vpop.permute.xlu0 %227
    %229 = vset.pattern.permute.xlu0 0
    %230 = vperm.xlu0 %229, %v41
    %v231 = vpop.permute.xlu0 %230
    %232 = vset.pattern.permute.xlu0 0
    %233 = vperm.xlu0 %232, %v42
    %v234 = vpop.permute.xlu0 %233
    %235 = vset.pattern.permute.xlu0 0
    %236 = vperm.xlu0 %235, %v43
    %v237 = vpop.permute.xlu0 %236
    %238 = vset.pattern.permute.xlu0 0
    %239 = vperm.xlu0 %238, %v44
    %v240 = vpop.permute.xlu0 %239
    %241 = vset.pattern.permute.xlu0 0
    %242 = vperm.xlu0 %241, %v45
    %v243 = vpop.permute.xlu0 %242
    %244 = vset.pattern.permute.xlu0 0
    %245 = vperm.xlu0 %244, %v46
    %v246 = vpop.permute.xlu0 %245
    %247 = vset.pattern.permute.xlu0 0
    %248 = vperm.xlu0 %247, %v47
    %v249 = vpop.permute.xlu0 %248
    %250 = vset.pattern.permute.xlu0 0
    %251 = vperm.xlu0 %250, %v48
    %v252 = vpop.permute.xlu0 %251
    %253 = vset.pattern.permute.xlu0 0
    %254 = vperm.xlu0 %253, %v49
    %v255 = vpop.permute.xlu0 %254
    %256 = vset.pattern.permute.xlu0 0
    %257 = vperm.xlu0 %256, %v50
    %v258 = vpop.permute.xlu0 %257
    %259 = vset.pattern.permute.xlu0 0
    %260 = vperm.xlu0 %259, %v51
    %v261 = vpop.permute.xlu0 %260
    %262 = vset.pattern.permute.xlu0 0
    %263 = vperm.xlu0 %262, %v52
    %v264 = vpop.permute.xlu0 %263
    %265 = vset.pattern.permute.xlu0 0
    %266 = vperm.xlu0 %265, %v53
    %v267 = vpop.permute.xlu0 %266
    %268 = vset.pattern.permute.xlu0 0
    %269 = vperm.xlu0 %268, %v54
    %v270 = vpop.permute.xlu0 %269
    %271 = vset.pattern.permute.xlu0 0
    %272 = vperm.xlu0 %271, %v55
    %v273 = vpop.permute.xlu0 %272
    %274 = vset.pattern.permute.xlu0 0
    %275 = vperm.xlu0 %274, %v56
    %v276 = vpop.permute.xlu0 %275
    %277 = vset.pattern.permute.xlu0 0
    %278 = vperm.xlu0 %277, %v57
    %v279 = vpop.permute.xlu0 %278
    %280 = vset.pattern.permute.xlu0 0
    %281 = vperm.xlu0 %280, %v58
    %v282 = vpop.permute.xlu0 %281
    %283 = vset.pattern.permute.xlu0 0
    %284 = vperm.xlu0 %283, %v59
    %v285 = vpop.permute.xlu0 %284
    %286 = vset.pattern.permute.xlu0 0
    %287 = vperm.xlu0 %286, %v60
    %v288 = vpop.permute.xlu0 %287
    %289 = vset.pattern.permute.xlu0 0
    %290 = vperm.xlu0 %289, %v61
    %v291 = vpop.permute.xlu0 %290
    %292 = vset.pattern.permute.xlu0 0
    %293 = vperm.xlu0 %292, %v62
    %v294 = vpop.permute.xlu0 %293
    %295 = vset.pattern.permute.xlu0 0
    %296 = vperm.xlu0 %295, %v63
    %v297 = vpop.permute.xlu0 %296
    %298 = vset.pattern.permute.xlu0 0
    %299 = vperm.xlu0 %298, %v64
    %v300 = vpop.permute.xlu0 %299
    %301 = vset.pattern.permute.xlu0 0
    %302 = vperm.xlu0 %301, %v65
    %v303 = vpop.permute.xlu0 %302
    %304 = vset.pattern.permute.xlu0 0
    %305 = vperm.xlu0 %304, %v66
    %v306 = vpop.permute.xlu0 %305
    %307 = vset.pattern.permute.xlu0 0
    %308 = vperm.xlu0 %307, %v67
    %v309 = vpop.permute.xlu0 %308
    %310 = vset.pattern.permute.xlu0 0
    %311 = vperm.xlu0 %310, %v68
    %v312 = vpop.permute.xlu0 %311
    %313 = vset.pattern.permute.xlu0 0
    %314 = vperm.xlu0 %313, %v69
    %v315 = vpop.permute.xlu0 %314
    %316 = vset.pattern.permute.xlu0 0
    %317 = vperm.xlu0 %316, %v70
    %v318 = vpop.permute.xlu0 %317
    %319 = vset.pattern.permute.xlu0 0
    %320 = vperm.xlu0 %319, %v71
    %v321 = vpop.permute.xlu0 %320
    %322 = vset.pattern.permute.xlu0 0
    %323 = vperm.xlu0 %322, %v72
    %v324 = vpop.permute.xlu0 %323
    %325 = vset.pattern.permute.xlu0 0
    %326 = vperm.xlu0 %325, %v73
    %v327 = vpop.permute.xlu0 %326
    %328 = vset.pattern.permute.xlu0 0
    %329 = vperm.xlu0 %328, %v74
    %v330 = vpop.permute.xlu0 %329
    %331 = vset.pattern.permute.xlu0 0
    %332 = vperm.xlu0 %331, %v75
    %v333 = vpop.permute.xlu0 %332
    %334 = vset.pattern.permute.xlu0 0
    %335 = vperm.xlu0 %334, %v76
    %v336 = vpop.permute.xlu0 %335
    %337 = vset.pattern.permute.xlu0 0
    %338 = vperm.xlu0 %337, %v77
    %v339 = vpop.permute.xlu0 %338
    %340 = vset.pattern.permute.xlu0 0
    %341 = vperm.xlu0 %340, %v78
    %v342 = vpop.permute.xlu0 %341
    %343 = vset.pattern.permute.xlu0 0
    %344 = vperm.xlu0 %343, %v79
    %v345 = vpop.permute.xlu0 %344
    %346 = vset.pattern.permute.xlu0 0
    %347 = vperm.xlu0 %346, %v80
    %v348 = vpop.permute.xlu0 %347
    %349 = vset.pattern.permute.xlu0 0
    %350 = vperm.xlu0 %349, %v81
    %v351 = vpop.permute.xlu0 %350
    %352 = vset.pattern.permute.xlu0 0
    %353 = vperm.xlu0 %352, %v82
    %v354 = vpop.permute.xlu0 %353
    %355 = vset.pattern.permute.xlu0 0
    %356 = vperm.xlu0 %355, %v83
    %v357 = vpop.permute.xlu0 %356
    %358 = vset.pattern.permute.xlu0 0
    %359 = vperm.xlu0 %358, %v84
    %v360 = vpop.permute.xlu0 %359
    %361 = vset.pattern.permute.xlu0 0
    %362 = vperm.xlu0 %361, %v85
    %v363 = vpop.permute.xlu0 %362
    %364 = vset.pattern.permute.xlu0 0
    %365 = vperm.xlu0 %364, %v86
    %v366 = vpop.permute.xlu0 %365
    %367 = vset.pattern.permute.xlu0 0
    %368 = vperm.xlu0 %367, %v87
    %v369 = vpop.permute.xlu0 %368
    %370 = vset.pattern.permute.xlu0 0
    %371 = vperm.xlu0 %370, %v88
    %v372 = vpop.permute.xlu0 %371
    %373 = vset.pattern.permute.xlu0 0
    %374 = vperm.xlu0 %373, %v89
    %v375 = vpop.permute.xlu0 %374
    %376 = vset.pattern.permute.xlu0 0
    %377 = vperm.xlu0 %376, %v90
    %v378 = vpop.permute.xlu0 %377
    %379 = vset.pattern.permute.xlu0 0
    %380 = vperm.xlu0 %379, %v91
    %v381 = vpop.permute.xlu0 %380
    %382 = vset.pattern.permute.xlu0 0
    %383 = vperm.xlu0 %382, %v92
    %v384 = vpop.permute.xlu0 %383
    %385 = vset.pattern.permute.xlu0 0
    %386 = vperm.xlu0 %385, %v93
    %v387 = vpop.permute.xlu0 %386
    %388 = vset.pattern.permute.xlu0 0
    %389 = vperm.xlu0 %388, %v94
    %v390 = vpop.permute.xlu0 %389
    %391 = vset.pattern.permute.xlu0 0
    %392 = vperm.xlu0 %391, %v95
    %v393 = vpop.permute.xlu0 %392
    %394 = vset.pattern.permute.xlu0 0
    %395 = vperm.xlu0 %394, %v96
    %v396 = vpop.permute.xlu0 %395
    %397 = vset.pattern.permute.xlu0 0
    %398 = vperm.xlu0 %397, %v97
    %v399 = vpop.permute.xlu0 %398
    %400 = vset.pattern.permute.xlu0 0
    %401 = vperm.xlu0 %400, %v98
    %v402 = vpop.permute.xlu0 %401
    %403 = vset.pattern.permute.xlu0 0
    %404 = vperm.xlu0 %403, %v99
    %v405 = vpop.permute.xlu0 %404
    %406 = vset.pattern.permute.xlu0 0
    %407 = vperm.xlu0 %406, %v100
    %v408 = vpop.permute.xlu0 %407
    %409 = vset.pattern.permute.xlu0 0
    %410 = vperm.xlu0 %409, %v101
    %v411 = vpop.permute.xlu0 %410
    %412 = vset.pattern.permute.xlu0 0
    %413 = vperm.xlu0 %412, %v102
    %v414 = vpop.permute.xlu0 %413
    %415 = vset.pattern.permute.xlu0 0
    %416 = vperm.xlu0 %415, %v103
    %v417 = vpop.permute.xlu0 %416
    %418 = vset.pattern.permute.xlu0 0
    %419 = vperm.xlu0 %418, %v104
    %v420 = vpop.permute.xlu0 %419
    %421 = vset.pattern.permute.xlu0 0
    %422 = vperm.xlu0 %421, %v105
    %v423 = vpop.permute.xlu0 %422
    %424 = vset.pattern.permute.xlu0 0
    %425 = vperm.xlu0 %424, %v106
    %v426 = vpop.permute.xlu0 %425
    %427 = vset.pattern.permute.xlu0 0
    %428 = vperm.xlu0 %427, %v107
    %v429 = vpop.permute.xlu0 %428
    %430 = vset.pattern.permute.xlu0 0
    %431 = vperm.xlu0 %430, %v108
    %v432 = vpop.permute.xlu0 %431
    %433 = vset.pattern.permute.xlu0 0
    %434 = vperm.xlu0 %433, %v109
    %v435 = vpop.permute.xlu0 %434
    %436 = vset.pattern.permute.xlu0 0
    %437 = vperm.xlu0 %436, %v110
    %v438 = vpop.permute.xlu0 %437
    %439 = vset.pattern.permute.xlu0 0
    %440 = vperm.xlu0 %439, %v111
    %v441 = vpop.permute.xlu0 %440
    %442 = vset.pattern.permute.xlu0 0
    %443 = vperm.xlu0 %442, %v112
    %v444 = vpop.permute.xlu0 %443
    %445 = vset.pattern.permute.xlu0 0
    %446 = vperm.xlu0 %445, %v113
    %v447 = vpop.permute.xlu0 %446
    %448 = vset.pattern.permute.xlu0 0
    %449 = vperm.xlu0 %448, %v114
    %v450 = vpop.permute.xlu0 %449
    %451 = vset.pattern.permute.xlu0 0
    %452 = vperm.xlu0 %451, %v115
    %v453 = vpop.permute.xlu0 %452
    %454 = vset.pattern.permute.xlu0 0
    %455 = vperm.xlu0 %454, %v116
    %v456 = vpop.permute.xlu0 %455
    %457 = vset.pattern.permute.xlu0 0
    %458 = vperm.xlu0 %457, %v117
    %v459 = vpop.permute.xlu0 %458
    %460 = vset.pattern.permute.xlu0 0
    %461 = vperm.xlu0 %460, %v118
    %v462 = vpop.permute.xlu0 %461
    %463 = vset.pattern.permute.xlu0 0
    %464 = vperm.xlu0 %463, %v119
    %v465 = vpop.permute.xlu0 %464
    %466 = vset.pattern.permute.xlu0 0
    %467 = vperm.xlu0 %466, %v120
    %v468 = vpop.permute.xlu0 %467
    %469 = vset.pattern.permute.xlu0 0
    %470 = vperm.xlu0 %469, %v121
    %v471 = vpop.permute.xlu0 %470
    %472 = vset.pattern.permute.xlu0 0
    %473 = vperm.xlu0 %472, %v122
    %v474 = vpop.permute.xlu0 %473
    %475 = vset.pattern.permute.xlu0 0
    %476 = vperm.xlu0 %475, %v123
    %v477 = vpop.permute.xlu0 %476
    %478 = vset.pattern.permute.xlu0 0
    %479 = vperm.xlu0 %478, %v124
    %v480 = vpop.permute.xlu0 %479
    %481 = vset.pattern.permute.xlu0 0
    %482 = vperm.xlu0 %481, %v125
    %v483 = vpop.permute.xlu0 %482
    %484 = vset.pattern.permute.xlu0 0
    %485 = vperm.xlu0 %484, %v126
    %v486 = vpop.permute.xlu0 %485
    %487 = vset.pattern.permute.xlu0 0
    %488 = vperm.xlu0 %487, %v127
    %v489 = vpop.permute.xlu0 %488
    %490 = vset.pattern.permute.xlu0 0
    %491 = vperm.xlu0 %490, %v128
    %v492 = vpop.permute.xlu0 %491
    %493 = vset.pattern.permute.xlu0 0
    %494 = vperm.xlu0 %493, %v129
    %v495 = vpop.permute.xlu0 %494
    %496 = vset.pattern.permute.xlu0 0
    %497 = vperm.xlu0 %496, %v130
    %v498 = vpop.permute.xlu0 %497
    %499 = vset.pattern.permute.xlu0 0
    %500 = vperm.xlu0 %499, %v131
    %v501 = vpop.permute.xlu0 %500
    %502 = vset.pattern.permute.xlu0 0
    %503 = vperm.xlu0 %502, %v132
    %v504 = vpop.permute.xlu0 %503
    %505 = vset.pattern.permute.xlu0 0
    %506 = vperm.xlu0 %505, %v133
    %v507 = vpop.permute.xlu0 %506
    %508 = vset.pattern.permute.xlu0 0
    %509 = vperm.xlu0 %508, %v134
    %v510 = vpop.permute.xlu0 %509
    %511 = vset.pattern.permute.xlu0 0
    %512 = vperm.xlu0 %511, %v135
    %v513 = vpop.permute.xlu0 %512
    %514 = vset.pattern.permute.xlu0 0
    %515 = vperm.xlu0 %514, %v136
    %v516 = vpop.permute.xlu0 %515
    %517 = vset.pattern.permute.xlu0 0
    %518 = vperm.xlu0 %517, %v137
    %v519 = vpop.permute.xlu0 %518
    %520 = vset.pattern.permute.xlu0 0
    %521 = vperm.xlu0 %520, %v138
    %v522 = vpop.permute.xlu0 %521
    %523 = vset.pattern.permute.xlu0 0
    %524 = vperm.xlu0 %523, %v139
    %v525 = vpop.permute.xlu0 %524
    %vm526 = vcmp.eq.s32.totalorder %v141, %v144
    %vm527 = vcmp.eq.s32.totalorder %v141, %v147
    %vm528 = vcmp.eq.s32.totalorder %v141, %v150
    %vm529 = vcmp.eq.s32.totalorder %v141, %v153
    %vm530 = vcmp.eq.s32.totalorder %v141, %v156
    %vm531 = vcmp.eq.s32.totalorder %v141, %v159
    %vm532 = vcmp.eq.s32.totalorder %v141, %v162
    %vm533 = vcmp.eq.s32.totalorder %v141, %v165
    %vm534 = vcmp.eq.s32.totalorder %v141, %v168
    %vm535 = vcmp.eq.s32.totalorder %v141, %v171
    %vm536 = vcmp.eq.s32.totalorder %v141, %v174
    %vm537 = vcmp.eq.s32.totalorder %v141, %v177
    %vm538 = vcmp.eq.s32.totalorder %v141, %v180
    %vm539 = vcmp.eq.s32.totalorder %v141, %v183
    %vm540 = vcmp.eq.s32.totalorder %v141, %v186
    %vm541 = vcmp.eq.s32.totalorder %v141, %v189
    %vm542 = vcmp.eq.s32.totalorder %v141, %v192
    %vm543 = vcmp.eq.s32.totalorder %v141, %v195
    %vm544 = vcmp.eq.s32.totalorder %v141, %v198
    %vm545 = vcmp.eq.s32.totalorder %v141, %v201
    %vm546 = vcmp.eq.s32.totalorder %v141, %v204
    %vm547 = vcmp.eq.s32.totalorder %v141, %v207
    %vm548 = vcmp.eq.s32.totalorder %v141, %v210
    %vm549 = vcmp.eq.s32.totalorder %v141, %v213
    %vm550 = vcmp.eq.s32.totalorder %v141, %v216
    %vm551 = vcmp.eq.s32.totalorder %v141, %v219
    %vm552 = vcmp.eq.s32.totalorder %v141, %v222
    %vm553 = vcmp.eq.s32.totalorder %v141, %v225
    %vm554 = vcmp.eq.s32.totalorder %v141, %v228
    %vm555 = vcmp.eq.s32.totalorder %v141, %v231
    %vm556 = vcmp.eq.s32.totalorder %v141, %v234
    %vm557 = vcmp.eq.s32.totalorder %v141, %v237
    %vm558 = vcmp.eq.s32.totalorder %v141, %v240
    %vm559 = vcmp.eq.s32.totalorder %v141, %v243
    %vm560 = vcmp.eq.s32.totalorder %v141, %v246
    %vm561 = vcmp.eq.s32.totalorder %v141, %v249
    %vm562 = vcmp.eq.s32.totalorder %v141, %v252
    %vm563 = vcmp.eq.s32.totalorder %v141, %v255
    %vm564 = vcmp.eq.s32.totalorder %v141, %v258
    %vm565 = vcmp.eq.s32.totalorder %v141, %v261
    %vm566 = vcmp.eq.s32.totalorder %v141, %v264
    %vm567 = vcmp.eq.s32.totalorder %v141, %v267
    %vm568 = vcmp.eq.s32.totalorder %v141, %v270
    %vm569 = vcmp.eq.s32.totalorder %v141, %v273
    %vm570 = vcmp.eq.s32.totalorder %v141, %v276
    %vm571 = vcmp.eq.s32.totalorder %v141, %v279
    %vm572 = vcmp.eq.s32.totalorder %v141, %v282
    %vm573 = vcmp.eq.s32.totalorder %v141, %v285
    %vm574 = vcmp.eq.s32.totalorder %v141, %v288
    %vm575 = vcmp.eq.s32.totalorder %v141, %v291
    %vm576 = vcmp.eq.s32.totalorder %v141, %v294
    %vm577 = vcmp.eq.s32.totalorder %v141, %v297
    %vm578 = vcmp.eq.s32.totalorder %v141, %v300
    %vm579 = vcmp.eq.s32.totalorder %v141, %v303
    %vm580 = vcmp.eq.s32.totalorder %v141, %v306
    %vm581 = vcmp.eq.s32.totalorder %v141, %v309
    %vm582 = vcmp.eq.s32.totalorder %v141, %v312
    %vm583 = vcmp.eq.s32.totalorder %v141, %v315
    %vm584 = vcmp.eq.s32.totalorder %v141, %v318
    %vm585 = vcmp.eq.s32.totalorder %v141, %v321
    %vm586 = vcmp.eq.s32.totalorder %v141, %v324
    %vm587 = vcmp.eq.s32.totalorder %v141, %v327
    %vm588 = vcmp.eq.s32.totalorder %v141, %v330
    %vm589 = vcmp.eq.s32.totalorder %v141, %v333
    %vm590 = vcmp.eq.s32.totalorder %v141, %v336
    %vm591 = vcmp.eq.s32.totalorder %v141, %v339
    %vm592 = vcmp.eq.s32.totalorder %v141, %v342
    %vm593 = vcmp.eq.s32.totalorder %v141, %v345
    %vm594 = vcmp.eq.s32.totalorder %v141, %v348
    %vm595 = vcmp.eq.s32.totalorder %v141, %v351
    %vm596 = vcmp.eq.s32.totalorder %v141, %v354
    %vm597 = vcmp.eq.s32.totalorder %v141, %v357
    %vm598 = vcmp.eq.s32.totalorder %v141, %v360
    %vm599 = vcmp.eq.s32.totalorder %v141, %v363
    %vm600 = vcmp.eq.s32.totalorder %v141, %v366
    %vm601 = vcmp.eq.s32.totalorder %v141, %v369
    %vm602 = vcmp.eq.s32.totalorder %v141, %v372
    %vm603 = vcmp.eq.s32.totalorder %v141, %v375
    %vm604 = vcmp.eq.s32.totalorder %v141, %v378
    %vm605 = vcmp.eq.s32.totalorder %v141, %v381
    %vm606 = vcmp.eq.s32.totalorder %v141, %v384
    %vm607 = vcmp.eq.s32.totalorder %v141, %v387
    %vm608 = vcmp.eq.s32.totalorder %v141, %v390
    %vm609 = vcmp.eq.s32.totalorder %v141, %v393
    %vm610 = vcmp.eq.s32.totalorder %v141, %v396
    %vm611 = vcmp.eq.s32.totalorder %v141, %v399
    %vm612 = vcmp.eq.s32.totalorder %v141, %v402
    %vm613 = vcmp.eq.s32.totalorder %v141, %v405
    %vm614 = vcmp.eq.s32.totalorder %v141, %v408
    %vm615 = vcmp.eq.s32.totalorder %v141, %v411
    %vm616 = vcmp.eq.s32.totalorder %v141, %v414
    %vm617 = vcmp.eq.s32.totalorder %v141, %v417
    %vm618 = vcmp.eq.s32.totalorder %v141, %v420
    %vm619 = vcmp.eq.s32.totalorder %v141, %v423
    %vm620 = vcmp.eq.s32.totalorder %v141, %v426
    %vm621 = vcmp.eq.s32.totalorder %v141, %v429
    %vm622 = vcmp.eq.s32.totalorder %v141, %v432
    %vm623 = vcmp.eq.s32.totalorder %v141, %v435
    %vm624 = vcmp.eq.s32.totalorder %v141, %v438
    %vm625 = vcmp.eq.s32.totalorder %v141, %v441
    %vm626 = vcmp.eq.s32.totalorder %v141, %v444
    %vm627 = vcmp.eq.s32.totalorder %v141, %v447
    %vm628 = vcmp.eq.s32.totalorder %v141, %v450
    %vm629 = vcmp.eq.s32.totalorder %v141, %v453
    %vm630 = vcmp.eq.s32.totalorder %v141, %v456
    %vm631 = vcmp.eq.s32.totalorder %v141, %v459
    %vm632 = vcmp.eq.s32.totalorder %v141, %v462
    %vm633 = vcmp.eq.s32.totalorder %v141, %v465
    %vm634 = vcmp.eq.s32.totalorder %v141, %v468
    %vm635 = vcmp.eq.s32.totalorder %v141, %v471
    %vm636 = vcmp.eq.s32.totalorder %v141, %v474
    %vm637 = vcmp.eq.s32.totalorder %v141, %v477
    %vm638 = vcmp.eq.s32.totalorder %v141, %v480
    %vm639 = vcmp.eq.s32.totalorder %v141, %v483
    %vm640 = vcmp.eq.s32.totalorder %v141, %v486
    %vm641 = vcmp.eq.s32.totalorder %v141, %v489
    %vm642 = vcmp.eq.s32.totalorder %v141, %v492
    %vm643 = vcmp.eq.s32.totalorder %v141, %v495
    %vm644 = vcmp.eq.s32.totalorder %v141, %v498
    %vm645 = vcmp.eq.s32.totalorder %v141, %v501
    %vm646 = vcmp.eq.s32.totalorder %v141, %v504
    %vm647 = vcmp.eq.s32.totalorder %v141, %v507
    %vm648 = vcmp.eq.s32.totalorder %v141, %v510
    %vm649 = vcmp.eq.s32.totalorder %v141, %v513
    %vm650 = vcmp.eq.s32.totalorder %v141, %v516
    %vm651 = vcmp.eq.s32.totalorder %v141, %v519
    %vm652 = vcmp.eq.s32.totalorder %v141, %v522
    %vm653 = vcmp.eq.s32.totalorder %v141, %v525
    %v654 = vsel %vm526, 1.0, 0.0
    %v655 = vsel %vm527, 1.0, 0.0
    %v656 = vsel %vm528, 1.0, 0.0
    %v657 = vsel %vm529, 1.0, 0.0
    %v658 = vsel %vm530, 1.0, 0.0
    %v659 = vsel %vm531, 1.0, 0.0
    %v660 = vsel %vm532, 1.0, 0.0
    %v661 = vsel %vm533, 1.0, 0.0
    %v662 = vsel %vm534, 1.0, 0.0
    %v663 = vsel %vm535, 1.0, 0.0
    %v664 = vsel %vm536, 1.0, 0.0
    %v665 = vsel %vm537, 1.0, 0.0
    %v666 = vsel %vm538, 1.0, 0.0
    %v667 = vsel %vm539, 1.0, 0.0
    %v668 = vsel %vm540, 1.0, 0.0
    %v669 = vsel %vm541, 1.0, 0.0
    %v670 = vsel %vm542, 1.0, 0.0
    %v671 = vsel %vm543, 1.0, 0.0
    %v672 = vsel %vm544, 1.0, 0.0
    %v673 = vsel %vm545, 1.0, 0.0
    %v674 = vsel %vm546, 1.0, 0.0
    %v675 = vsel %vm547, 1.0, 0.0
    %v676 = vsel %vm548, 1.0, 0.0
    %v677 = vsel %vm549, 1.0, 0.0
    %v678 = vsel %vm550, 1.0, 0.0
    %v679 = vsel %vm551, 1.0, 0.0
    %v680 = vsel %vm552, 1.0, 0.0
    %v681 = vsel %vm553, 1.0, 0.0
    %v682 = vsel %vm554, 1.0, 0.0
    %v683 = vsel %vm555, 1.0, 0.0
    %v684 = vsel %vm556, 1.0, 0.0
    %v685 = vsel %vm557, 1.0, 0.0
    %v686 = vsel %vm558, 1.0, 0.0
    %v687 = vsel %vm559, 1.0, 0.0
    %v688 = vsel %vm560, 1.0, 0.0
    %v689 = vsel %vm561, 1.0, 0.0
    %v690 = vsel %vm562, 1.0, 0.0
    %v691 = vsel %vm563, 1.0, 0.0
    %v692 = vsel %vm564, 1.0, 0.0
    %v693 = vsel %vm565, 1.0, 0.0
    %v694 = vsel %vm566, 1.0, 0.0
    %v695 = vsel %vm567, 1.0, 0.0
    %v696 = vsel %vm568, 1.0, 0.0
    %v697 = vsel %vm569, 1.0, 0.0
    %v698 = vsel %vm570, 1.0, 0.0
    %v699 = vsel %vm571, 1.0, 0.0
    %v700 = vsel %vm572, 1.0, 0.0
    %v701 = vsel %vm573, 1.0, 0.0
    %v702 = vsel %vm574, 1.0, 0.0
    %v703 = vsel %vm575, 1.0, 0.0
    %v704 = vsel %vm576, 1.0, 0.0
    %v705 = vsel %vm577, 1.0, 0.0
    %v706 = vsel %vm578, 1.0, 0.0
    %v707 = vsel %vm579, 1.0, 0.0
    %v708 = vsel %vm580, 1.0, 0.0
    %v709 = vsel %vm581, 1.0, 0.0
    %v710 = vsel %vm582, 1.0, 0.0
    %v711 = vsel %vm583, 1.0, 0.0
    %v712 = vsel %vm584, 1.0, 0.0
    %v713 = vsel %vm585, 1.0, 0.0
    %v714 = vsel %vm586, 1.0, 0.0
    %v715 = vsel %vm587, 1.0, 0.0
    %v716 = vsel %vm588, 1.0, 0.0
    %v717 = vsel %vm589, 1.0, 0.0
    %v718 = vsel %vm590, 1.0, 0.0
    %v719 = vsel %vm591, 1.0, 0.0
    %v720 = vsel %vm592, 1.0, 0.0
    %v721 = vsel %vm593, 1.0, 0.0
    %v722 = vsel %vm594, 1.0, 0.0
    %v723 = vsel %vm595, 1.0, 0.0
    %v724 = vsel %vm596, 1.0, 0.0
    %v725 = vsel %vm597, 1.0, 0.0
    %v726 = vsel %vm598, 1.0, 0.0
    %v727 = vsel %vm599, 1.0, 0.0
    %v728 = vsel %vm600, 1.0, 0.0
    %v729 = vsel %vm601, 1.0, 0.0
    %v730 = vsel %vm602, 1.0, 0.0
    %v731 = vsel %vm603, 1.0, 0.0
    %v732 = vsel %vm604, 1.0, 0.0
    %v733 = vsel %vm605, 1.0, 0.0
    %v734 = vsel %vm606, 1.0, 0.0
    %v735 = vsel %vm607, 1.0, 0.0
    %v736 = vsel %vm608, 1.0, 0.0
    %v737 = vsel %vm609, 1.0, 0.0
    %v738 = vsel %vm610, 1.0, 0.0
    %v739 = vsel %vm611, 1.0, 0.0
    %v740 = vsel %vm612, 1.0, 0.0
    %v741 = vsel %vm613, 1.0, 0.0
    %v742 = vsel %vm614, 1.0, 0.0
    %v743 = vsel %vm615, 1.0, 0.0
    %v744 = vsel %vm616, 1.0, 0.0
    %v745 = vsel %vm617, 1.0, 0.0
    %v746 = vsel %vm618, 1.0, 0.0
    %v747 = vsel %vm619, 1.0, 0.0
    %v748 = vsel %vm620, 1.0, 0.0
    %v749 = vsel %vm621, 1.0, 0.0
    %v750 = vsel %vm622, 1.0, 0.0
    %v751 = vsel %vm623, 1.0, 0.0
    %v752 = vsel %vm624, 1.0, 0.0
    %v753 = vsel %vm625, 1.0, 0.0
    %v754 = vsel %vm626, 1.0, 0.0
    %v755 = vsel %vm627, 1.0, 0.0
    %v756 = vsel %vm628, 1.0, 0.0
    %v757 = vsel %vm629, 1.0, 0.0
    %v758 = vsel %vm630, 1.0, 0.0
    %v759 = vsel %vm631, 1.0, 0.0
    %v760 = vsel %vm632, 1.0, 0.0
    %v761 = vsel %vm633, 1.0, 0.0
    %v762 = vsel %vm634, 1.0, 0.0
    %v763 = vsel %vm635, 1.0, 0.0
    %v764 = vsel %vm636, 1.0, 0.0
    %v765 = vsel %vm637, 1.0, 0.0
    %v766 = vsel %vm638, 1.0, 0.0
    %v767 = vsel %vm639, 1.0, 0.0
    %v768 = vsel %vm640, 1.0, 0.0
    %v769 = vsel %vm641, 1.0, 0.0
    %v770 = vsel %vm642, 1.0, 0.0
    %v771 = vsel %vm643, 1.0, 0.0
    %v772 = vsel %vm644, 1.0, 0.0
    %v773 = vsel %vm645, 1.0, 0.0
    %v774 = vsel %vm646, 1.0, 0.0
    %v775 = vsel %vm647, 1.0, 0.0
    %v776 = vsel %vm648, 1.0, 0.0
    %v777 = vsel %vm649, 1.0, 0.0
    %v778 = vsel %vm650, 1.0, 0.0
    %v779 = vsel %vm651, 1.0, 0.0
    %v780 = vsel %vm652, 1.0, 0.0
    %v781 = vsel %vm653, 1.0, 0.0
    %v782 = vld [vmem:[%s1] sm:$0xff]
    %v783 = vld [vmem:[%s1 + $0x8] sm:$0xff]
    %v784 = vld [vmem:[%s1 + $0x10] sm:$0xff]
    %v785 = vld [vmem:[%s1 + $0x18] sm:$0xff]
    %v786 = vld [vmem:[%s1 + $0x20] sm:$0xff]
    %v787 = vld [vmem:[%s1 + $0x28] sm:$0xff]
    %v788 = vld [vmem:[%s1 + $0x30] sm:$0xff]
    %v789 = vld [vmem:[%s1 + $0x38] sm:$0xff]
    %v790 = vld [vmem:[%s1 + $0x40] sm:$0xff]
    %v791 = vld [vmem:[%s1 + $0x48] sm:$0xff]
    %v792 = vld [vmem:[%s1 + $0x50] sm:$0xff]
    %v793 = vld [vmem:[%s1 + $0x58] sm:$0xff]
    %v794 = vld [vmem:[%s1 + $0x60] sm:$0xff]
    %v795 = vld [vmem:[%s1 + $0x68] sm:$0xff]
    %v796 = vld [vmem:[%s1 + $0x70] sm:$0xff]
    %v797 = vld [vmem:[%s1 + $0x78] sm:$0xff]
    %798 = vmatprep.subr.mxu0 0.0
    %799 = vmatpush1.msra.mxu0 %v782
    %800 = vmatprep.subr.mxu0 0.0
    %801 = vmatpush1.msra.mxu0 %v783
    %802 = vmatprep.subr.mxu0 0.0
    %803 = vmatpush1.msra.mxu0 %v784
    %804 = vmatprep.subr.mxu0 0.0
    %805 = vmatpush1.msra.mxu0 %v785
    %806 = vmatprep.subr.mxu0 0.0
    %807 = vmatpush1.msra.mxu0 %v786
    %808 = vmatprep.subr.mxu0 0.0
    %809 = vmatpush1.msra.mxu0 %v787
    %810 = vmatprep.subr.mxu0 0.0
    %811 = vmatpush1.msra.mxu0 %v788
    %812 = vmatprep.subr.mxu0 0.0
    %813 = vmatpush1.msra.mxu0 %v789
    %814 = vmatprep.subr.mxu0 0.0
    %815 = vmatpush1.msra.mxu0 %v790
    %816 = vmatprep.subr.mxu0 0.0
    %817 = vmatpush1.msra.mxu0 %v791
    %818 = vmatprep.subr.mxu0 0.0
    %819 = vmatpush1.msra.mxu0 %v792
    %820 = vmatprep.subr.mxu0 0.0
    %821 = vmatpush1.msra.mxu0 %v793
    %822 = vmatprep.subr.mxu0 0.0
    %823 = vmatpush1.msra.mxu0 %v794
    %824 = vmatprep.subr.mxu0 0.0
    %825 = vmatpush1.msra.mxu0 %v795
    %826 = vmatprep.subr.mxu0 0.0
    %827 = vmatpush1.msra.mxu0 %v796
    %828 = vmatprep.subr.mxu0 0.0
    %829 = vmatpush1.msra.mxu0 %v797
    %830 = vmatprep.subr.mxu0 0.0
    %831 = vmatpush1.msra.mxu0 0.0
    %832 = vmatprep.subr.mxu0 0.0
    %833 = vmatpush1.msra.mxu0 0.0
    %834 = vmatprep.subr.mxu0 0.0
    %835 = vmatpush1.msra.mxu0 0.0
    %836 = vmatprep.subr.mxu0 0.0
    %837 = vmatpush1.msra.mxu0 0.0
    %838 = vmatprep.subr.mxu0 0.0
    %839 = vmatpush1.msra.mxu0 0.0
    %840 = vmatprep.subr.mxu0 0.0
    %841 = vmatpush1.msra.mxu0 0.0
    %842 = vmatprep.subr.mxu0 0.0
    %843 = vmatpush1.msra.mxu0 0.0
    %844 = vmatprep.subr.mxu0 0.0
    %845 = vmatpush1.msra.mxu0 0.0
    %846 = vmatprep.subr.mxu0 0.0
    %847 = vmatpush1.msra.mxu0 0.0
    %848 = vmatprep.subr.mxu0 0.0
    %849 = vmatpush1.msra.mxu0 0.0
    %850 = vmatprep.subr.mxu0 0.0
    %851 = vmatpush1.msra.mxu0 0.0
    %852 = vmatprep.subr.mxu0 0.0
    %853 = vmatpush1.msra.mxu0 0.0
    %854 = vmatprep.subr.mxu0 0.0
    %855 = vmatpush1.msra.mxu0 0.0
    %856 = vmatprep.subr.mxu0 0.0
    %857 = vmatpush1.msra.mxu0 0.0
    %858 = vmatprep.subr.mxu0 0.0
    %859 = vmatpush1.msra.mxu0 0.0
    %860 = vmatprep.subr.mxu0 0.0
    %861 = vmatpush1.msra.mxu0 0.0
    %862 = vmatprep.mubr.f32.mxu0 0.0
    %863 = vmatmul.mubr.f32.gmra.mrb[0].mxu0 %v654
    %v864 = vpop.f32.mrb[0].mxu0
    %v865 = vadd.f32 0.0, %v864
    %v866 = vpop.f32.mrb[0].mxu0
    %867 = vmatprep.mubr.f32.mxu0 0.0
    %868 = vmatmul.mubr.f32.gmra.mrb[0].mxu0 %v655
    %v869 = vpop.f32.mrb[0].mxu0
    %v870 = vadd.f32 0.0, %v869
    %v871 = vpop.f32.mrb[0].mxu0
    %872 = vmatprep.mubr.f32.mxu0 0.0
    %873 = vmatmul.mubr.f32.gmra.mrb[0].mxu0 %v656
    %v874 = vpop.f32.mrb[0].mxu0
    %v875 = vadd.f32 0.0, %v874
    %v876 = vpop.f32.mrb[0].mxu0
    %877 = vmatprep.mubr.f32.mxu0 0.0
    %878 = vmatmul.mubr.f32.gmra.mrb[0].mxu0 %v657
    %v879 = vpop.f32.mrb[0].mxu0
    %v880 = vadd.f32 0.0, %v879
    %v881 = vpop.f32.mrb[0].mxu0
    %882 = vmatprep.mubr.f32.mxu0 0.0
    %883 = vmatmul.mubr.f32.gmra.mrb[0].mxu0 %v658
    %v884 = vpop.f32.mrb[0].mxu0
    %v885 = vadd.f32 0.0, %v884
    %v886 = vpop.f32.mrb[0].mxu0
    %887 = vmatprep.mubr.f32.mxu0 0.0
    %888 = vmatmul.mubr.f32.gmra.mrb[0].mxu0 %v659
    %v889 = vpop.f32.mrb[0].mxu0
    %v890 = vadd.f32 0.0, %v889
    %v891 = vpop.f32.mrb[0].mxu0
    %892 = vmatprep.mubr.f32.mxu0 0.0
    %893 = vmatmul.mubr.f32.gmra.mrb[0].mxu0 %v660
    %v894 = vpop.f32.mrb[0].mxu0
    %v895 = vadd.f32 0.0, %v894
    %v896 = vpop.f32.mrb[0].mxu0
    %897 = vmatprep.mubr.f32.mxu0 0.0
    %898 = vmatmul.mubr.f32.gmra.mrb[0].mxu0 %v661
    %v899 = vpop.f32.mrb[0].mxu0
    %v900 = vadd.f32 0.0, %v899
    %v901 = vpop.f32.mrb[0].mxu0
    %902 = vmatprep.mubr.f32.mxu0 0.0
    %903 = vmatmul.mubr.f32.gmra.mrb[0].mxu0 %v662
    %v904 = vpop.f32.mrb[0].mxu0
    %v905 = vadd.f32 0.0, %v904
    %v906 = vpop.f32.mrb[0].mxu0
    %907 = vmatprep.mubr.f32.mxu0 0.0
    %908 = vmatmul.mubr.f32.gmra.mrb[0].mxu0 %v663
    %v909 = vpop.f32.mrb[0].mxu0
    %v910 = vadd.f32 0.0, %v909
    %v911 = vpop.f32.mrb[0].mxu0
    %912 = vmatprep.mubr.f32.mxu0 0.0
    %913 = vmatmul.mubr.f32.gmra.mrb[0].mxu0 %v664
    %v914 = vpop.f32.mrb[0].mxu0
    %v915 = vadd.f32 0.0, %v914
    %v916 = vpop.f32.mrb[0].mxu0
    %917 = vmatprep.mubr.f32.mxu0 0.0
    %918 = vmatmul.mubr.f32.gmra.mrb[0].mxu0 %v665
    %v919 = vpop.f32.mrb[0].mxu0
    %v920 = vadd.f32 0.0, %v919
    %v921 = vpop.f32.mrb[0].mxu0
    %922 = vmatprep.mubr.f32.mxu0 0.0
    %923 = vmatmul.mubr.f32.gmra.mrb[0].mxu0 %v666
    %v924 = vpop.f32.mrb[0].mxu0
    %v925 = vadd.f32 0.0, %v924
    %v926 = vpop.f32.mrb[0].mxu0
    %927 = vmatprep.mubr.f32.mxu0 0.0
    %928 = vmatmul.mubr.f32.gmra.mrb[0].mxu0 %v667
    %v929 = vpop.f32.mrb[0].mxu0
    %v930 = vadd.f32 0.0, %v929
    %v931 = vpop.f32.mrb[0].mxu0
    %932 = vmatprep.mubr.f32.mxu0 0.0
    %933 = vmatmul.mubr.f32.gmra.mrb[0].mxu0 %v668
    %v934 = vpop.f32.mrb[0].mxu0
    %v935 = vadd.f32 0.0, %v934
    %v936 = vpop.f32.mrb[0].mxu0
    %937 = vmatprep.mubr.f32.mxu0 0.0
    %938 = vmatmul.mubr.f32.gmra.mrb[0].mxu0 %v669
    %v939 = vpop.f32.mrb[0].mxu0
    %v940 = vadd.f32 0.0, %v939
    %v941 = vpop.f32.mrb[0].mxu0
    %942 = vmatprep.mubr.f32.mxu0 0.0
    %943 = vmatmul.mubr.f32.gmra.mrb[0].mxu0 %v670
    %v944 = vpop.f32.mrb[0].mxu0
    %v945 = vadd.f32 0.0, %v944
    %v946 = vpop.f32.mrb[0].mxu0
    %947 = vmatprep.mubr.f32.mxu0 0.0
    %948 = vmatmul.mubr.f32.gmra.mrb[0].mxu0 %v671
    %v949 = vpop.f32.mrb[0].mxu0
    %v950 = vadd.f32 0.0, %v949
    %v951 = vpop.f32.mrb[0].mxu0
    %952 = vmatprep.mubr.f32.mxu0 0.0
    %953 = vmatmul.mubr.f32.gmra.mrb[0].mxu0 %v672
    %v954 = vpop.f32.mrb[0].mxu0
    %v955 = vadd.f32 0.0, %v954
    %v956 = vpop.f32.mrb[0].mxu0
    %957 = vmatprep.mubr.f32.mxu0 0.0
    %958 = vmatmul.mubr.f32.gmra.mrb[0].mxu0 %v673
    %v959 = vpop.f32.mrb[0].mxu0
    %v960 = vadd.f32 0.0, %v959
    %v961 = vpop.f32.mrb[0].mxu0
    %962 = vmatprep.mubr.f32.mxu0 0.0
    %963 = vmatmul.mubr.f32.gmra.mrb[0].mxu0 %v674
    %v964 = vpop.f32.mrb[0].mxu0
    %v965 = vadd.f32 0.0, %v964
    %v966 = vpop.f32.mrb[0].mxu0
    %967 = vmatprep.mubr.f32.mxu0 0.0
    %968 = vmatmul.mubr.f32.gmra.mrb[0].mxu0 %v675
    %v969 = vpop.f32.mrb[0].mxu0
    %v970 = vadd.f32 0.0, %v969
    %v971 = vpop.f32.mrb[0].mxu0
    %972 = vmatprep.mubr.f32.mxu0 0.0
    %973 = vmatmul.mubr.f32.gmra.mrb[0].mxu0 %v676
    %v974 = vpop.f32.mrb[0].mxu0
    %v975 = vadd.f32 0.0, %v974
    %v976 = vpop.f32.mrb[0].mxu0
    %977 = vmatprep.mubr.f32.mxu0 0.0
    %978 = vmatmul.mubr.f32.gmra.mrb[0].mxu0 %v677
    %v979 = vpop.f32.mrb[0].mxu0
    %v980 = vadd.f32 0.0, %v979
    %v981 = vpop.f32.mrb[0].mxu0
    %982 = vmatprep.mubr.f32.mxu0 0.0
    %983 = vmatmul.mubr.f32.gmra.mrb[0].mxu0 %v678
    %v984 = vpop.f32.mrb[0].mxu0
    %v985 = vadd.f32 0.0, %v984
    %v986 = vpop.f32.mrb[0].mxu0
    %987 = vmatprep.mubr.f32.mxu0 0.0
    %988 = vmatmul.mubr.f32.gmra.mrb[0].mxu0 %v679
    %v989 = vpop.f32.mrb[0].mxu0
    %v990 = vadd.f32 0.0, %v989
    %v991 = vpop.f32.mrb[0].mxu0
    %992 = vmatprep.mubr.f32.mxu0 0.0
    %993 = vmatmul.mubr.f32.gmra.mrb[0].mxu0 %v680
    %v994 = vpop.f32.mrb[0].mxu0
    %v995 = vadd.f32 0.0, %v994
    %v996 = vpop.f32.mrb[0].mxu0
    %997 = vmatprep.mubr.f32.mxu0 0.0
    %998 = vmatmul.mubr.f32.gmra.mrb[0].mxu0 %v681
    %v999 = vpop.f32.mrb[0].mxu0
    %v1000 = vadd.f32 0.0, %v999
    %v1001 = vpop.f32.mrb[0].mxu0
    %1002 = vmatprep.mubr.f32.mxu0 0.0
    %1003 = vmatmul.mubr.f32.gmra.mrb[0].mxu0 %v682
    %v1004 = vpop.f32.mrb[0].mxu0
    %v1005 = vadd.f32 0.0, %v1004
    %v1006 = vpop.f32.mrb[0].mxu0
    %1007 = vmatprep.mubr.f32.mxu0 0.0
    %1008 = vmatmul.mubr.f32.gmra.mrb[0].mxu0 %v683
    %v1009 = vpop.f32.mrb[0].mxu0
    %v1010 = vadd.f32 0.0, %v1009
    %v1011 = vpop.f32.mrb[0].mxu0
    %1012 = vmatprep.mubr.f32.mxu0 0.0
    %1013 = vmatmul.mubr.f32.gmra.mrb[0].mxu0 %v684
    %v1014 = vpop.f32.mrb[0].mxu0
    %v1015 = vadd.f32 0.0, %v1014
    %v1016 = vpop.f32.mrb[0].mxu0
    %1017 = vmatprep.mubr.f32.mxu0 0.0
    %1018 = vmatmul.mubr.f32.gmra.mrb[0].mxu0 %v685
    %v1019 = vpop.f32.mrb[0].mxu0
    %v1020 = vadd.f32 0.0, %v1019
    %v1021 = vpop.f32.mrb[0].mxu0
    %1022 = vmatprep.mubr.f32.mxu0 0.0
    %1023 = vmatmul.mubr.f32.gmra.mrb[0].mxu0 %v686
    %v1024 = vpop.f32.mrb[0].mxu0
    %v1025 = vadd.f32 0.0, %v1024
    %v1026 = vpop.f32.mrb[0].mxu0
    %1027 = vmatprep.mubr.f32.mxu0 0.0
    %1028 = vmatmul.mubr.f32.gmra.mrb[0].mxu0 %v687
    %v1029 = vpop.f32.mrb[0].mxu0
    %v1030 = vadd.f32 0.0, %v1029
    %v1031 = vpop.f32.mrb[0].mxu0
    %1032 = vmatprep.mubr.f32.mxu0 0.0
    %1033 = vmatmul.mubr.f32.gmra.mrb[0].mxu0 %v688
    %v1034 = vpop.f32.mrb[0].mxu0
    %v1035 = vadd.f32 0.0, %v1034
    %v1036 = vpop.f32.mrb[0].mxu0
    %1037 = vmatprep.mubr.f32.mxu0 0.0
    %1038 = vmatmul.mubr.f32.gmra.mrb[0].mxu0 %v689
    %v1039 = vpop.f32.mrb[0].mxu0
    %v1040 = vadd.f32 0.0, %v1039
    %v1041 = vpop.f32.mrb[0].mxu0
    %1042 = vmatprep.mubr.f32.mxu0 0.0
    %1043 = vmatmul.mubr.f32.gmra.mrb[0].mxu0 %v690
    %v1044 = vpop.f32.mrb[0].mxu0
    %v1045 = vadd.f32 0.0, %v1044
    %v1046 = vpop.f32.mrb[0].mxu0
    %1047 = vmatprep.mubr.f32.mxu0 0.0
    %1048 = vmatmul.mubr.f32.gmra.mrb[0].mxu0 %v691
    %v1049 = vpop.f32.mrb[0].mxu0
    %v1050 = vadd.f32 0.0, %v1049
    %v1051 = vpop.f32.mrb[0].mxu0
    %1052 = vmatprep.mubr.f32.mxu0 0.0
    %1053 = vmatmul.mubr.f32.gmra.mrb[0].mxu0 %v692
    %v1054 = vpop.f32.mrb[0].mxu0
    %v1055 = vadd.f32 0.0, %v1054
    %v1056 = vpop.f32.mrb[0].mxu0
    %1057 = vmatprep.mubr.f32.mxu0 0.0
    %1058 = vmatmul.mubr.f32.gmra.mrb[0].mxu0 %v693
    %v1059 = vpop.f32.mrb[0].mxu0
    %v1060 = vadd.f32 0.0, %v1059
    %v1061 = vpop.f32.mrb[0].mxu0
    %1062 = vmatprep.mubr.f32.mxu0 0.0
    %1063 = vmatmul.mubr.f32.gmra.mrb[0].mxu0 %v694
    %v1064 = vpop.f32.mrb[0].mxu0
    %v1065 = vadd.f32 0.0, %v1064
    %v1066 = vpop.f32.mrb[0].mxu0
    %1067 = vmatprep.mubr.f32.mxu0 0.0
    %1068 = vmatmul.mubr.f32.gmra.mrb[0].mxu0 %v695
    %v1069 = vpop.f32.mrb[0].mxu0
    %v1070 = vadd.f32 0.0, %v1069
    %v1071 = vpop.f32.mrb[0].mxu0
    %1072 = vmatprep.mubr.f32.mxu0 0.0
    %1073 = vmatmul.mubr.f32.gmra.mrb[0].mxu0 %v696
    %v1074 = vpop.f32.mrb[0].mxu0
    %v1075 = vadd.f32 0.0, %v1074
    %v1076 = vpop.f32.mrb[0].mxu0
    %1077 = vmatprep.mubr.f32.mxu0 0.0
    %1078 = vmatmul.mubr.f32.gmra.mrb[0].mxu0 %v697
    %v1079 = vpop.f32.mrb[0].mxu0
    %v1080 = vadd.f32 0.0, %v1079
    %v1081 = vpop.f32.mrb[0].mxu0
    %1082 = vmatprep.mubr.f32.mxu0 0.0
    %1083 = vmatmul.mubr.f32.gmra.mrb[0].mxu0 %v698
    %v1084 = vpop.f32.mrb[0].mxu0
    %v1085 = vadd.f32 0.0, %v1084
    %v1086 = vpop.f32.mrb[0].mxu0
    %1087 = vmatprep.mubr.f32.mxu0 0.0
    %1088 = vmatmul.mubr.f32.gmra.mrb[0].mxu0 %v699
    %v1089 = vpop.f32.mrb[0].mxu0
    %v1090 = vadd.f32 0.0, %v1089
    %v1091 = vpop.f32.mrb[0].mxu0
    %1092 = vmatprep.mubr.f32.mxu0 0.0
    %1093 = vmatmul.mubr.f32.gmra.mrb[0].mxu0 %v700
    %v1094 = vpop.f32.mrb[0].mxu0
    %v1095 = vadd.f32 0.0, %v1094
    %v1096 = vpop.f32.mrb[0].mxu0
    %1097 = vmatprep.mubr.f32.mxu0 0.0
    %1098 = vmatmul.mubr.f32.gmra.mrb[0].mxu0 %v701
    %v1099 = vpop.f32.mrb[0].mxu0
    %v1100 = vadd.f32 0.0, %v1099
    %v1101 = vpop.f32.mrb[0].mxu0
    %1102 = vmatprep.mubr.f32.mxu0 0.0
    %1103 = vmatmul.mubr.f32.gmra.mrb[0].mxu0 %v702
    %v1104 = vpop.f32.mrb[0].mxu0
    %v1105 = vadd.f32 0.0, %v1104
    %v1106 = vpop.f32.mrb[0].mxu0
    %1107 = vmatprep.mubr.f32.mxu0 0.0
    %1108 = vmatmul.mubr.f32.gmra.mrb[0].mxu0 %v703
    %v1109 = vpop.f32.mrb[0].mxu0
    %v1110 = vadd.f32 0.0, %v1109
    %v1111 = vpop.f32.mrb[0].mxu0
    %1112 = vmatprep.mubr.f32.mxu0 0.0
    %1113 = vmatmul.mubr.f32.gmra.mrb[0].mxu0 %v704
    %v1114 = vpop.f32.mrb[0].mxu0
    %v1115 = vadd.f32 0.0, %v1114
    %v1116 = vpop.f32.mrb[0].mxu0
    %1117 = vmatprep.mubr.f32.mxu0 0.0
    %1118 = vmatmul.mubr.f32.gmra.mrb[0].mxu0 %v705
    %v1119 = vpop.f32.mrb[0].mxu0
    %v1120 = vadd.f32 0.0, %v1119
    %v1121 = vpop.f32.mrb[0].mxu0
    %1122 = vmatprep.mubr.f32.mxu0 0.0
    %1123 = vmatmul.mubr.f32.gmra.mrb[0].mxu0 %v706
    %v1124 = vpop.f32.mrb[0].mxu0
    %v1125 = vadd.f32 0.0, %v1124
    %v1126 = vpop.f32.mrb[0].mxu0
    %1127 = vmatprep.mubr.f32.mxu0 0.0
    %1128 = vmatmul.mubr.f32.gmra.mrb[0].mxu0 %v707
    %v1129 = vpop.f32.mrb[0].mxu0
    %v1130 = vadd.f32 0.0, %v1129
    %v1131 = vpop.f32.mrb[0].mxu0
    %1132 = vmatprep.mubr.f32.mxu0 0.0
    %1133 = vmatmul.mubr.f32.gmra.mrb[0].mxu0 %v708
    %v1134 = vpop.f32.mrb[0].mxu0
    %v1135 = vadd.f32 0.0, %v1134
    %v1136 = vpop.f32.mrb[0].mxu0
    %1137 = vmatprep.mubr.f32.mxu0 0.0
    %1138 = vmatmul.mubr.f32.gmra.mrb[0].mxu0 %v709
    %v1139 = vpop.f32.mrb[0].mxu0
    %v1140 = vadd.f32 0.0, %v1139
    %v1141 = vpop.f32.mrb[0].mxu0
    %1142 = vmatprep.mubr.f32.mxu0 0.0
    %1143 = vmatmul.mubr.f32.gmra.mrb[0].mxu0 %v710
    %v1144 = vpop.f32.mrb[0].mxu0
    %v1145 = vadd.f32 0.0, %v1144
    %v1146 = vpop.f32.mrb[0].mxu0
    %1147 = vmatprep.mubr.f32.mxu0 0.0
    %1148 = vmatmul.mubr.f32.gmra.mrb[0].mxu0 %v711
    %v1149 = vpop.f32.mrb[0].mxu0
    %v1150 = vadd.f32 0.0, %v1149
    %v1151 = vpop.f32.mrb[0].mxu0
    %1152 = vmatprep.mubr.f32.mxu0 0.0
    %1153 = vmatmul.mubr.f32.gmra.mrb[0].mxu0 %v712
    %v1154 = vpop.f32.mrb[0].mxu0
    %v1155 = vadd.f32 0.0, %v1154
    %v1156 = vpop.f32.mrb[0].mxu0
    %1157 = vmatprep.mubr.f32.mxu0 0.0
    %1158 = vmatmul.mubr.f32.gmra.mrb[0].mxu0 %v713
    %v1159 = vpop.f32.mrb[0].mxu0
    %v1160 = vadd.f32 0.0, %v1159
    %v1161 = vpop.f32.mrb[0].mxu0
    %1162 = vmatprep.mubr.f32.mxu0 0.0
    %1163 = vmatmul.mubr.f32.gmra.mrb[0].mxu0 %v714
    %v1164 = vpop.f32.mrb[0].mxu0
    %v1165 = vadd.f32 0.0, %v1164
    %v1166 = vpop.f32.mrb[0].mxu0
    %1167 = vmatprep.mubr.f32.mxu0 0.0
    %1168 = vmatmul.mubr.f32.gmra.mrb[0].mxu0 %v715
    %v1169 = vpop.f32.mrb[0].mxu0
    %v1170 = vadd.f32 0.0, %v1169
    %v1171 = vpop.f32.mrb[0].mxu0
    %1172 = vmatprep.mubr.f32.mxu0 0.0
    %1173 = vmatmul.mubr.f32.gmra.mrb[0].mxu0 %v716
    %v1174 = vpop.f32.mrb[0].mxu0
    %v1175 = vadd.f32 0.0, %v1174
    %v1176 = vpop.f32.mrb[0].mxu0
    %1177 = vmatprep.mubr.f32.mxu0 0.0
    %1178 = vmatmul.mubr.f32.gmra.mrb[0].mxu0 %v717
    %v1179 = vpop.f32.mrb[0].mxu0
    %v1180 = vadd.f32 0.0, %v1179
    %v1181 = vpop.f32.mrb[0].mxu0
    %1182 = vmatprep.mubr.f32.mxu0 0.0
    %1183 = vmatmul.mubr.f32.gmra.mrb[0].mxu0 %v718
    %v1184 = vpop.f32.mrb[0].mxu0
    %v1185 = vadd.f32 0.0, %v1184
    %v1186 = vpop.f32.mrb[0].mxu0
    %1187 = vmatprep.mubr.f32.mxu0 0.0
    %1188 = vmatmul.mubr.f32.gmra.mrb[0].mxu0 %v719
    %v1189 = vpop.f32.mrb[0].mxu0
    %v1190 = vadd.f32 0.0, %v1189
    %v1191 = vpop.f32.mrb[0].mxu0
    %1192 = vmatprep.mubr.f32.mxu0 0.0
    %1193 = vmatmul.mubr.f32.gmra.mrb[0].mxu0 %v720
    %v1194 = vpop.f32.mrb[0].mxu0
    %v1195 = vadd.f32 0.0, %v1194
    %v1196 = vpop.f32.mrb[0].mxu0
    %1197 = vmatprep.mubr.f32.mxu0 0.0
    %1198 = vmatmul.mubr.f32.gmra.mrb[0].mxu0 %v721
    %v1199 = vpop.f32.mrb[0].mxu0
    %v1200 = vadd.f32 0.0, %v1199
    %v1201 = vpop.f32.mrb[0].mxu0
    %1202 = vmatprep.mubr.f32.mxu0 0.0
    %1203 = vmatmul.mubr.f32.gmra.mrb[0].mxu0 %v722
    %v1204 = vpop.f32.mrb[0].mxu0
    %v1205 = vadd.f32 0.0, %v1204
    %v1206 = vpop.f32.mrb[0].mxu0
    %1207 = vmatprep.mubr.f32.mxu0 0.0
    %1208 = vmatmul.mubr.f32.gmra.mrb[0].mxu0 %v723
    %v1209 = vpop.f32.mrb[0].mxu0
    %v1210 = vadd.f32 0.0, %v1209
    %v1211 = vpop.f32.mrb[0].mxu0
    %1212 = vmatprep.mubr.f32.mxu0 0.0
    %1213 = vmatmul.mubr.f32.gmra.mrb[0].mxu0 %v724
    %v1214 = vpop.f32.mrb[0].mxu0
    %v1215 = vadd.f32 0.0, %v1214
    %v1216 = vpop.f32.mrb[0].mxu0
    %1217 = vmatprep.mubr.f32.mxu0 0.0
    %1218 = vmatmul.mubr.f32.gmra.mrb[0].mxu0 %v725
    %v1219 = vpop.f32.mrb[0].mxu0
    %v1220 = vadd.f32 0.0, %v1219
    %v1221 = vpop.f32.mrb[0].mxu0
    %1222 = vmatprep.mubr.f32.mxu0 0.0
    %1223 = vmatmul.mubr.f32.gmra.mrb[0].mxu0 %v726
    %v1224 = vpop.f32.mrb[0].mxu0
    %v1225 = vadd.f32 0.0, %v1224
    %v1226 = vpop.f32.mrb[0].mxu0
    %1227 = vmatprep.mubr.f32.mxu0 0.0
    %1228 = vmatmul.mubr.f32.gmra.mrb[0].mxu0 %v727
    %v1229 = vpop.f32.mrb[0].mxu0
    %v1230 = vadd.f32 0.0, %v1229
    %v1231 = vpop.f32.mrb[0].mxu0
    %1232 = vmatprep.mubr.f32.mxu0 0.0
    %1233 = vmatmul.mubr.f32.gmra.mrb[0].mxu0 %v728
    %v1234 = vpop.f32.mrb[0].mxu0
    %v1235 = vadd.f32 0.0, %v1234
    %v1236 = vpop.f32.mrb[0].mxu0
    %1237 = vmatprep.mubr.f32.mxu0 0.0
    %1238 = vmatmul.mubr.f32.gmra.mrb[0].mxu0 %v729
    %v1239 = vpop.f32.mrb[0].mxu0
    %v1240 = vadd.f32 0.0, %v1239
    %v1241 = vpop.f32.mrb[0].mxu0
    %1242 = vmatprep.mubr.f32.mxu0 0.0
    %1243 = vmatmul.mubr.f32.gmra.mrb[0].mxu0 %v730
    %v1244 = vpop.f32.mrb[0].mxu0
    %v1245 = vadd.f32 0.0, %v1244
    %v1246 = vpop.f32.mrb[0].mxu0
    %1247 = vmatprep.mubr.f32.mxu0 0.0
    %1248 = vmatmul.mubr.f32.gmra.mrb[0].mxu0 %v731
    %v1249 = vpop.f32.mrb[0].mxu0
    %v1250 = vadd.f32 0.0, %v1249
    %v1251 = vpop.f32.mrb[0].mxu0
    %1252 = vmatprep.mubr.f32.mxu0 0.0
    %1253 = vmatmul.mubr.f32.gmra.mrb[0].mxu0 %v732
    %v1254 = vpop.f32.mrb[0].mxu0
    %v1255 = vadd.f32 0.0, %v1254
    %v1256 = vpop.f32.mrb[0].mxu0
    %1257 = vmatprep.mubr.f32.mxu0 0.0
    %1258 = vmatmul.mubr.f32.gmra.mrb[0].mxu0 %v733
    %v1259 = vpop.f32.mrb[0].mxu0
    %v1260 = vadd.f32 0.0, %v1259
    %v1261 = vpop.f32.mrb[0].mxu0
    %1262 = vmatprep.mubr.f32.mxu0 0.0
    %1263 = vmatmul.mubr.f32.gmra.mrb[0].mxu0 %v734
    %v1264 = vpop.f32.mrb[0].mxu0
    %v1265 = vadd.f32 0.0, %v1264
    %v1266 = vpop.f32.mrb[0].mxu0
    %1267 = vmatprep.mubr.f32.mxu0 0.0
    %1268 = vmatmul.mubr.f32.gmra.mrb[0].mxu0 %v735
    %v1269 = vpop.f32.mrb[0].mxu0
    %v1270 = vadd.f32 0.0, %v1269
    %v1271 = vpop.f32.mrb[0].mxu0
    %1272 = vmatprep.mubr.f32.mxu0 0.0
    %1273 = vmatmul.mubr.f32.gmra.mrb[0].mxu0 %v736
    %v1274 = vpop.f32.mrb[0].mxu0
    %v1275 = vadd.f32 0.0, %v1274
    %v1276 = vpop.f32.mrb[0].mxu0
    %1277 = vmatprep.mubr.f32.mxu0 0.0
    %1278 = vmatmul.mubr.f32.gmra.mrb[0].mxu0 %v737
    %v1279 = vpop.f32.mrb[0].mxu0
    %v1280 = vadd.f32 0.0, %v1279
    %v1281 = vpop.f32.mrb[0].mxu0
    %1282 = vmatprep.mubr.f32.mxu0 0.0
    %1283 = vmatmul.mubr.f32.gmra.mrb[0].mxu0 %v738
    %v1284 = vpop.f32.mrb[0].mxu0
    %v1285 = vadd.f32 0.0, %v1284
    %v1286 = vpop.f32.mrb[0].mxu0
    %1287 = vmatprep.mubr.f32.mxu0 0.0
    %1288 = vmatmul.mubr.f32.gmra.mrb[0].mxu0 %v739
    %v1289 = vpop.f32.mrb[0].mxu0
    %v1290 = vadd.f32 0.0, %v1289
    %v1291 = vpop.f32.mrb[0].mxu0
    %1292 = vmatprep.mubr.f32.mxu0 0.0
    %1293 = vmatmul.mubr.f32.gmra.mrb[0].mxu0 %v740
    %v1294 = vpop.f32.mrb[0].mxu0
    %v1295 = vadd.f32 0.0, %v1294
    %v1296 = vpop.f32.mrb[0].mxu0
    %1297 = vmatprep.mubr.f32.mxu0 0.0
    %1298 = vmatmul.mubr.f32.gmra.mrb[0].mxu0 %v741
    %v1299 = vpop.f32.mrb[0].mxu0
    %v1300 = vadd.f32 0.0, %v1299
    %v1301 = vpop.f32.mrb[0].mxu0
    %1302 = vmatprep.mubr.f32.mxu0 0.0
    %1303 = vmatmul.mubr.f32.gmra.mrb[0].mxu0 %v742
    %v1304 = vpop.f32.mrb[0].mxu0
    %v1305 = vadd.f32 0.0, %v1304
    %v1306 = vpop.f32.mrb[0].mxu0
    %1307 = vmatprep.mubr.f32.mxu0 0.0
    %1308 = vmatmul.mubr.f32.gmra.mrb[0].mxu0 %v743
    %v1309 = vpop.f32.mrb[0].mxu0
    %v1310 = vadd.f32 0.0, %v1309
    %v1311 = vpop.f32.mrb[0].mxu0
    %1312 = vmatprep.mubr.f32.mxu0 0.0
    %1313 = vmatmul.mubr.f32.gmra.mrb[0].mxu0 %v744
    %v1314 = vpop.f32.mrb[0].mxu0
    %v1315 = vadd.f32 0.0, %v1314
    %v1316 = vpop.f32.mrb[0].mxu0
    %1317 = vmatprep.mubr.f32.mxu0 0.0
    %1318 = vmatmul.mubr.f32.gmra.mrb[0].mxu0 %v745
    %v1319 = vpop.f32.mrb[0].mxu0
    %v1320 = vadd.f32 0.0, %v1319
    %v1321 = vpop.f32.mrb[0].mxu0
    %1322 = vmatprep.mubr.f32.mxu0 0.0
    %1323 = vmatmul.mubr.f32.gmra.mrb[0].mxu0 %v746
    %v1324 = vpop.f32.mrb[0].mxu0
    %v1325 = vadd.f32 0.0, %v1324
    %v1326 = vpop.f32.mrb[0].mxu0
    %1327 = vmatprep.mubr.f32.mxu0 0.0
    %1328 = vmatmul.mubr.f32.gmra.mrb[0].mxu0 %v747
    %v1329 = vpop.f32.mrb[0].mxu0
    %v1330 = vadd.f32 0.0, %v1329
    %v1331 = vpop.f32.mrb[0].mxu0
    %1332 = vmatprep.mubr.f32.mxu0 0.0
    %1333 = vmatmul.mubr.f32.gmra.mrb[0].mxu0 %v748
    %v1334 = vpop.f32.mrb[0].mxu0
    %v1335 = vadd.f32 0.0, %v1334
    %v1336 = vpop.f32.mrb[0].mxu0
    %1337 = vmatprep.mubr.f32.mxu0 0.0
    %1338 = vmatmul.mubr.f32.gmra.mrb[0].mxu0 %v749
    %v1339 = vpop.f32.mrb[0].mxu0
    %v1340 = vadd.f32 0.0, %v1339
    %v1341 = vpop.f32.mrb[0].mxu0
    %1342 = vmatprep.mubr.f32.mxu0 0.0
    %1343 = vmatmul.mubr.f32.gmra.mrb[0].mxu0 %v750
    %v1344 = vpop.f32.mrb[0].mxu0
    %v1345 = vadd.f32 0.0, %v1344
    %v1346 = vpop.f32.mrb[0].mxu0
    %1347 = vmatprep.mubr.f32.mxu0 0.0
    %1348 = vmatmul.mubr.f32.gmra.mrb[0].mxu0 %v751
    %v1349 = vpop.f32.mrb[0].mxu0
    %v1350 = vadd.f32 0.0, %v1349
    %v1351 = vpop.f32.mrb[0].mxu0
    %1352 = vmatprep.mubr.f32.mxu0 0.0
    %1353 = vmatmul.mubr.f32.gmra.mrb[0].mxu0 %v752
    %v1354 = vpop.f32.mrb[0].mxu0
    %v1355 = vadd.f32 0.0, %v1354
    %v1356 = vpop.f32.mrb[0].mxu0
    %1357 = vmatprep.mubr.f32.mxu0 0.0
    %1358 = vmatmul.mubr.f32.gmra.mrb[0].mxu0 %v753
    %v1359 = vpop.f32.mrb[0].mxu0
    %v1360 = vadd.f32 0.0, %v1359
    %v1361 = vpop.f32.mrb[0].mxu0
    %1362 = vmatprep.mubr.f32.mxu0 0.0
    %1363 = vmatmul.mubr.f32.gmra.mrb[0].mxu0 %v754
    %v1364 = vpop.f32.mrb[0].mxu0
    %v1365 = vadd.f32 0.0, %v1364
    %v1366 = vpop.f32.mrb[0].mxu0
    %1367 = vmatprep.mubr.f32.mxu0 0.0
    %1368 = vmatmul.mubr.f32.gmra.mrb[0].mxu0 %v755
    %v1369 = vpop.f32.mrb[0].mxu0
    %v1370 = vadd.f32 0.0, %v1369
    %v1371 = vpop.f32.mrb[0].mxu0
    %1372 = vmatprep.mubr.f32.mxu0 0.0
    %1373 = vmatmul.mubr.f32.gmra.mrb[0].mxu0 %v756
    %v1374 = vpop.f32.mrb[0].mxu0
    %v1375 = vadd.f32 0.0, %v1374
    %v1376 = vpop.f32.mrb[0].mxu0
    %1377 = vmatprep.mubr.f32.mxu0 0.0
    %1378 = vmatmul.mubr.f32.gmra.mrb[0].mxu0 %v757
    %v1379 = vpop.f32.mrb[0].mxu0
    %v1380 = vadd.f32 0.0, %v1379
    %v1381 = vpop.f32.mrb[0].mxu0
    %1382 = vmatprep.mubr.f32.mxu0 0.0
    %1383 = vmatmul.mubr.f32.gmra.mrb[0].mxu0 %v758
    %v1384 = vpop.f32.mrb[0].mxu0
    %v1385 = vadd.f32 0.0, %v1384
    %v1386 = vpop.f32.mrb[0].mxu0
    %1387 = vmatprep.mubr.f32.mxu0 0.0
    %1388 = vmatmul.mubr.f32.gmra.mrb[0].mxu0 %v759
    %v1389 = vpop.f32.mrb[0].mxu0
    %v1390 = vadd.f32 0.0, %v1389
    %v1391 = vpop.f32.mrb[0].mxu0
    %1392 = vmatprep.mubr.f32.mxu0 0.0
    %1393 = vmatmul.mubr.f32.gmra.mrb[0].mxu0 %v760
    %v1394 = vpop.f32.mrb[0].mxu0
    %v1395 = vadd.f32 0.0, %v1394
    %v1396 = vpop.f32.mrb[0].mxu0
    %1397 = vmatprep.mubr.f32.mxu0 0.0
    %1398 = vmatmul.mubr.f32.gmra.mrb[0].mxu0 %v761
    %v1399 = vpop.f32.mrb[0].mxu0
    %v1400 = vadd.f32 0.0, %v1399
    %v1401 = vpop.f32.mrb[0].mxu0
    %1402 = vmatprep.mubr.f32.mxu0 0.0
    %1403 = vmatmul.mubr.f32.gmra.mrb[0].mxu0 %v762
    %v1404 = vpop.f32.mrb[0].mxu0
    %v1405 = vadd.f32 0.0, %v1404
    %v1406 = vpop.f32.mrb[0].mxu0
    %1407 = vmatprep.mubr.f32.mxu0 0.0
    %1408 = vmatmul.mubr.f32.gmra.mrb[0].mxu0 %v763
    %v1409 = vpop.f32.mrb[0].mxu0
    %v1410 = vadd.f32 0.0, %v1409
    %v1411 = vpop.f32.mrb[0].mxu0
    %1412 = vmatprep.mubr.f32.mxu0 0.0
    %1413 = vmatmul.mubr.f32.gmra.mrb[0].mxu0 %v764
    %v1414 = vpop.f32.mrb[0].mxu0
    %v1415 = vadd.f32 0.0, %v1414
    %v1416 = vpop.f32.mrb[0].mxu0
    %1417 = vmatprep.mubr.f32.mxu0 0.0
    %1418 = vmatmul.mubr.f32.gmra.mrb[0].mxu0 %v765
    %v1419 = vpop.f32.mrb[0].mxu0
    %v1420 = vadd.f32 0.0, %v1419
    %v1421 = vpop.f32.mrb[0].mxu0
    %1422 = vmatprep.mubr.f32.mxu0 0.0
    %1423 = vmatmul.mubr.f32.gmra.mrb[0].mxu0 %v766
    %v1424 = vpop.f32.mrb[0].mxu0
    %v1425 = vadd.f32 0.0, %v1424
    %v1426 = vpop.f32.mrb[0].mxu0
    %1427 = vmatprep.mubr.f32.mxu0 0.0
    %1428 = vmatmul.mubr.f32.gmra.mrb[0].mxu0 %v767
    %v1429 = vpop.f32.mrb[0].mxu0
    %v1430 = vadd.f32 0.0, %v1429
    %v1431 = vpop.f32.mrb[0].mxu0
    %1432 = vmatprep.mubr.f32.mxu0 0.0
    %1433 = vmatmul.mubr.f32.gmra.mrb[0].mxu0 %v768
    %v1434 = vpop.f32.mrb[0].mxu0
    %v1435 = vadd.f32 0.0, %v1434
    %v1436 = vpop.f32.mrb[0].mxu0
    %1437 = vmatprep.mubr.f32.mxu0 0.0
    %1438 = vmatmul.mubr.f32.gmra.mrb[0].mxu0 %v769
    %v1439 = vpop.f32.mrb[0].mxu0
    %v1440 = vadd.f32 0.0, %v1439
    %v1441 = vpop.f32.mrb[0].mxu0
    %1442 = vmatprep.mubr.f32.mxu0 0.0
    %1443 = vmatmul.mubr.f32.gmra.mrb[0].mxu0 %v770
    %v1444 = vpop.f32.mrb[0].mxu0
    %v1445 = vadd.f32 0.0, %v1444
    %v1446 = vpop.f32.mrb[0].mxu0
    %1447 = vmatprep.mubr.f32.mxu0 0.0
    %1448 = vmatmul.mubr.f32.gmra.mrb[0].mxu0 %v771
    %v1449 = vpop.f32.mrb[0].mxu0
    %v1450 = vadd.f32 0.0, %v1449
    %v1451 = vpop.f32.mrb[0].mxu0
    %1452 = vmatprep.mubr.f32.mxu0 0.0
    %1453 = vmatmul.mubr.f32.gmra.mrb[0].mxu0 %v772
    %v1454 = vpop.f32.mrb[0].mxu0
    %v1455 = vadd.f32 0.0, %v1454
    %v1456 = vpop.f32.mrb[0].mxu0
    %1457 = vmatprep.mubr.f32.mxu0 0.0
    %1458 = vmatmul.mubr.f32.gmra.mrb[0].mxu0 %v773
    %v1459 = vpop.f32.mrb[0].mxu0
    %v1460 = vadd.f32 0.0, %v1459
    %v1461 = vpop.f32.mrb[0].mxu0
    %1462 = vmatprep.mubr.f32.mxu0 0.0
    %1463 = vmatmul.mubr.f32.gmra.mrb[0].mxu0 %v774
    %v1464 = vpop.f32.mrb[0].mxu0
    %v1465 = vadd.f32 0.0, %v1464
    %v1466 = vpop.f32.mrb[0].mxu0
    %1467 = vmatprep.mubr.f32.mxu0 0.0
    %1468 = vmatmul.mubr.f32.gmra.mrb[0].mxu0 %v775
    %v1469 = vpop.f32.mrb[0].mxu0
    %v1470 = vadd.f32 0.0, %v1469
    %v1471 = vpop.f32.mrb[0].mxu0
    %1472 = vmatprep.mubr.f32.mxu0 0.0
    %1473 = vmatmul.mubr.f32.gmra.mrb[0].mxu0 %v776
    %v1474 = vpop.f32.mrb[0].mxu0
    %v1475 = vadd.f32 0.0, %v1474
    %v1476 = vpop.f32.mrb[0].mxu0
    %1477 = vmatprep.mubr.f32.mxu0 0.0
    %1478 = vmatmul.mubr.f32.gmra.mrb[0].mxu0 %v777
    %v1479 = vpop.f32.mrb[0].mxu0
    %v1480 = vadd.f32 0.0, %v1479
    %v1481 = vpop.f32.mrb[0].mxu0
    %1482 = vmatprep.mubr.f32.mxu0 0.0
    %1483 = vmatmul.mubr.f32.gmra.mrb[0].mxu0 %v778
    %v1484 = vpop.f32.mrb[0].mxu0
    %v1485 = vadd.f32 0.0, %v1484
    %v1486 = vpop.f32.mrb[0].mxu0
    %1487 = vmatprep.mubr.f32.mxu0 0.0
    %1488 = vmatmul.mubr.f32.gmra.mrb[0].mxu0 %v779
    %v1489 = vpop.f32.mrb[0].mxu0
    %v1490 = vadd.f32 0.0, %v1489
    %v1491 = vpop.f32.mrb[0].mxu0
    %1492 = vmatprep.mubr.f32.mxu0 0.0
    %1493 = vmatmul.mubr.f32.gmra.mrb[0].mxu0 %v780
    %v1494 = vpop.f32.mrb[0].mxu0
    %v1495 = vadd.f32 0.0, %v1494
    %v1496 = vpop.f32.mrb[0].mxu0
    %1497 = vmatprep.mubr.f32.mxu0 0.0
    %1498 = vmatmul.mubr.f32.gmra.mrb[0].mxu0 %v781
    %v1499 = vpop.f32.mrb[0].mxu0
    %v1500 = vadd.f32 0.0, %v1499
    %v1501 = vpop.f32.mrb[0].mxu0
    %1502 = vdwg.mxu0
    %1503 = vst [vmem:[#allocation2] sm:$0xff] %v865
    %1504 = vst [vmem:[#allocation2 + $0x8] sm:$0xff] %v870
    %1505 = vst [vmem:[#allocation2 + $0x10] sm:$0xff] %v875
    %1506 = vst [vmem:[#allocation2 + $0x18] sm:$0xff] %v880
    %1507 = vst [vmem:[#allocation2 + $0x20] sm:$0xff] %v885
    %1508 = vst [vmem:[#allocation2 + $0x28] sm:$0xff] %v890
    %1509 = vst [vmem:[#allocation2 + $0x30] sm:$0xff] %v895
    %1510 = vst [vmem:[#allocation2 + $0x38] sm:$0xff] %v900
    %1511 = vst [vmem:[#allocation2 + $0x40] sm:$0xff] %v905
    %1512 = vst [vmem:[#allocation2 + $0x48] sm:$0xff] %v910
    %1513 = vst [vmem:[#allocation2 + $0x50] sm:$0xff] %v915
    %1514 = vst [vmem:[#allocation2 + $0x58] sm:$0xff] %v920
    %1515 = vst [vmem:[#allocation2 + $0x60] sm:$0xff] %v925
    %1516 = vst [vmem:[#allocation2 + $0x68] sm:$0xff] %v930
    %1517 = vst [vmem:[#allocation2 + $0x70] sm:$0xff] %v935
    %1518 = vst [vmem:[#allocation2 + $0x78] sm:$0xff] %v940
    %1519 = vst [vmem:[#allocation2 + $0x80] sm:$0xff] %v945
    %1520 = vst [vmem:[#allocation2 + $0x88] sm:$0xff] %v950
    %1521 = vst [vmem:[#allocation2 + $0x90] sm:$0xff] %v955
    %1522 = vst [vmem:[#allocation2 + $0x98] sm:$0xff] %v960
    %1523 = vst [vmem:[#allocation2 + $0xa0] sm:$0xff] %v965
    %1524 = vst [vmem:[#allocation2 + $0xa8] sm:$0xff] %v970
    %1525 = vst [vmem:[#allocation2 + $0xb0] sm:$0xff] %v975
    %1526 = vst [vmem:[#allocation2 + $0xb8] sm:$0xff] %v980
    %1527 = vst [vmem:[#allocation2 + $0xc0] sm:$0xff] %v985
    %1528 = vst [vmem:[#allocation2 + $0xc8] sm:$0xff] %v990
    %1529 = vst [vmem:[#allocation2 + $0xd0] sm:$0xff] %v995
    %1530 = vst [vmem:[#allocation2 + $0xd8] sm:$0xff] %v1000
    %1531 = vst [vmem:[#allocation2 + $0xe0] sm:$0xff] %v1005
    %1532 = vst [vmem:[#allocation2 + $0xe8] sm:$0xff] %v1010
    %1533 = vst [vmem:[#allocation2 + $0xf0] sm:$0xff] %v1015
    %1534 = vst [vmem:[#allocation2 + $0xf8] sm:$0xff] %v1020
    %1535 = vst [vmem:[#allocation2 + $0x100] sm:$0xff] %v1025
    %1536 = vst [vmem:[#allocation2 + $0x108] sm:$0xff] %v1030
    %1537 = vst [vmem:[#allocation2 + $0x110] sm:$0xff] %v1035
    %1538 = vst [vmem:[#allocation2 + $0x118] sm:$0xff] %v1040
    %1539 = vst [vmem:[#allocation2 + $0x120] sm:$0xff] %v1045
    %1540 = vst [vmem:[#allocation2 + $0x128] sm:$0xff] %v1050
    %1541 = vst [vmem:[#allocation2 + $0x130] sm:$0xff] %v1055
    %1542 = vst [vmem:[#allocation2 + $0x138] sm:$0xff] %v1060
    %1543 = vst [vmem:[#allocation2 + $0x140] sm:$0xff] %v1065
    %1544 = vst [vmem:[#allocation2 + $0x148] sm:$0xff] %v1070
    %1545 = vst [vmem:[#allocation2 + $0x150] sm:$0xff] %v1075
    %1546 = vst [vmem:[#allocation2 + $0x158] sm:$0xff] %v1080
    %1547 = vst [vmem:[#allocation2 + $0x160] sm:$0xff] %v1085
    %1548 = vst [vmem:[#allocation2 + $0x168] sm:$0xff] %v1090
    %1549 = vst [vmem:[#allocation2 + $0x170] sm:$0xff] %v1095
    %1550 = vst [vmem:[#allocation2 + $0x178] sm:$0xff] %v1100
    %1551 = vst [vmem:[#allocation2 + $0x180] sm:$0xff] %v1105
    %1552 = vst [vmem:[#allocation2 + $0x188] sm:$0xff] %v1110
    %1553 = vst [vmem:[#allocation2 + $0x190] sm:$0xff] %v1115
    %1554 = vst [vmem:[#allocation2 + $0x198] sm:$0xff] %v1120
    %1555 = vst [vmem:[#allocation2 + $0x1a0] sm:$0xff] %v1125
    %1556 = vst [vmem:[#allocation2 + $0x1a8] sm:$0xff] %v1130
    %1557 = vst [vmem:[#allocation2 + $0x1b0] sm:$0xff] %v1135
    %1558 = vst [vmem:[#allocation2 + $0x1b8] sm:$0xff] %v1140
    %1559 = vst [vmem:[#allocation2 + $0x1c0] sm:$0xff] %v1145
    %1560 = vst [vmem:[#allocation2 + $0x1c8] sm:$0xff] %v1150
    %1561 = vst [vmem:[#allocation2 + $0x1d0] sm:$0xff] %v1155
    %1562 = vst [vmem:[#allocation2 + $0x1d8] sm:$0xff] %v1160
    %1563 = vst [vmem:[#allocation2 + $0x1e0] sm:$0xff] %v1165
    %1564 = vst [vmem:[#allocation2 + $0x1e8] sm:$0xff] %v1170
    %1565 = vst [vmem:[#allocation2 + $0x1f0] sm:$0xff] %v1175
    %1566 = vst [vmem:[#allocation2 + $0x1f8] sm:$0xff] %v1180
    %1567 = vst [vmem:[#allocation2 + $0x200] sm:$0xff] %v1185
    %1568 = vst [vmem:[#allocation2 + $0x208] sm:$0xff] %v1190
    %1569 = vst [vmem:[#allocation2 + $0x210] sm:$0xff] %v1195
    %1570 = vst [vmem:[#allocation2 + $0x218] sm:$0xff] %v1200
    %1571 = vst [vmem:[#allocation2 + $0x220] sm:$0xff] %v1205
    %1572 = vst [vmem:[#allocation2 + $0x228] sm:$0xff] %v1210
    %1573 = vst [vmem:[#allocation2 + $0x230] sm:$0xff] %v1215
    %1574 = vst [vmem:[#allocation2 + $0x238] sm:$0xff] %v1220
    %1575 = vst [vmem:[#allocation2 + $0x240] sm:$0xff] %v1225
    %1576 = vst [vmem:[#allocation2 + $0x248] sm:$0xff] %v1230
    %1577 = vst [vmem:[#allocation2 + $0x250] sm:$0xff] %v1235
    %1578 = vst [vmem:[#allocation2 + $0x258] sm:$0xff] %v1240
    %1579 = vst [vmem:[#allocation2 + $0x260] sm:$0xff] %v1245
    %1580 = vst [vmem:[#allocation2 + $0x268] sm:$0xff] %v1250
    %1581 = vst [vmem:[#allocation2 + $0x270] sm:$0xff] %v1255
    %1582 = vst [vmem:[#allocation2 + $0x278] sm:$0xff] %v1260
    %1583 = vst [vmem:[#allocation2 + $0x280] sm:$0xff] %v1265
    %1584 = vst [vmem:[#allocation2 + $0x288] sm:$0xff] %v1270
    %1585 = vst [vmem:[#allocation2 + $0x290] sm:$0xff] %v1275
    %1586 = vst [vmem:[#allocation2 + $0x298] sm:$0xff] %v1280
    %1587 = vst [vmem:[#allocation2 + $0x2a0] sm:$0xff] %v1285
    %1588 = vst [vmem:[#allocation2 + $0x2a8] sm:$0xff] %v1290
    %1589 = vst [vmem:[#allocation2 + $0x2b0] sm:$0xff] %v1295
    %1590 = vst [vmem:[#allocation2 + $0x2b8] sm:$0xff] %v1300
    %1591 = vst [vmem:[#allocation2 + $0x2c0] sm:$0xff] %v1305
    %1592 = vst [vmem:[#allocation2 + $0x2c8] sm:$0xff] %v1310
    %1593 = vst [vmem:[#allocation2 + $0x2d0] sm:$0xff] %v1315
    %1594 = vst [vmem:[#allocation2 + $0x2d8] sm:$0xff] %v1320
    %1595 = vst [vmem:[#allocation2 + $0x2e0] sm:$0xff] %v1325
    %1596 = vst [vmem:[#allocation2 + $0x2e8] sm:$0xff] %v1330
    %1597 = vst [vmem:[#allocation2 + $0x2f0] sm:$0xff] %v1335
    %1598 = vst [vmem:[#allocation2 + $0x2f8] sm:$0xff] %v1340
    %1599 = vst [vmem:[#allocation2 + $0x300] sm:$0xff] %v1345
    %1600 = vst [vmem:[#allocation2 + $0x308] sm:$0xff] %v1350
    %1601 = vst [vmem:[#allocation2 + $0x310] sm:$0xff] %v1355
    %1602 = vst [vmem:[#allocation2 + $0x318] sm:$0xff] %v1360
    %1603 = vst [vmem:[#allocation2 + $0x320] sm:$0xff] %v1365
    %1604 = vst [vmem:[#allocation2 + $0x328] sm:$0xff] %v1370
    %1605 = vst [vmem:[#allocation2 + $0x330] sm:$0xff] %v1375
    %1606 = vst [vmem:[#allocation2 + $0x338] sm:$0xff] %v1380
    %1607 = vst [vmem:[#allocation2 + $0x340] sm:$0xff] %v1385
    %1608 = vst [vmem:[#allocation2 + $0x348] sm:$0xff] %v1390
    %1609 = vst [vmem:[#allocation2 + $0x350] sm:$0xff] %v1395
    %1610 = vst [vmem:[#allocation2 + $0x358] sm:$0xff] %v1400
    %1611 = vst [vmem:[#allocation2 + $0x360] sm:$0xff] %v1405
    %1612 = vst [vmem:[#allocation2 + $0x368] sm:$0xff] %v1410
    %1613 = vst [vmem:[#allocation2 + $0x370] sm:$0xff] %v1415
    %1614 = vst [vmem:[#allocation2 + $0x378] sm:$0xff] %v1420
    %1615 = vst [vmem:[#allocation2 + $0x380] sm:$0xff] %v1425
    %1616 = vst [vmem:[#allocation2 + $0x388] sm:$0xff] %v1430
    %1617 = vst [vmem:[#allocation2 + $0x390] sm:$0xff] %v1435
    %1618 = vst [vmem:[#allocation2 + $0x398] sm:$0xff] %v1440
    %1619 = vst [vmem:[#allocation2 + $0x3a0] sm:$0xff] %v1445
    %1620 = vst [vmem:[#allocation2 + $0x3a8] sm:$0xff] %v1450
    %1621 = vst [vmem:[#allocation2 + $0x3b0] sm:$0xff] %v1455
    %1622 = vst [vmem:[#allocation2 + $0x3b8] sm:$0xff] %v1460
    %1623 = vst [vmem:[#allocation2 + $0x3c0] sm:$0xff] %v1465
    %1624 = vst [vmem:[#allocation2 + $0x3c8] sm:$0xff] %v1470
    %1625 = vst [vmem:[#allocation2 + $0x3d0] sm:$0xff] %v1475
    %1626 = vst [vmem:[#allocation2 + $0x3d8] sm:$0xff] %v1480
    %1627 = vst [vmem:[#allocation2 + $0x3e0] sm:$0xff] %v1485
    %1628 = vst [vmem:[#allocation2 + $0x3e8] sm:$0xff] %v1490
    %1629 = vst [vmem:[#allocation2 + $0x3f0] sm:$0xff] %v1495
    %1630 = vst [vmem:[#allocation2 + $0x3f8] sm:$0xff] %v1500
    // Predicated region
    $region10: #{tpu_custom_call.1} parent=1 // pred_check
      _
    $region11: #{tpu_custom_call.1} parent=1 // pred_check_branch
      %1632 = sbr.rel (0) target = $region13
    $region12: #{tpu_custom_call.1} parent=1 // pred_region
      %s1634 = ssub.s32 16384, 16384
      %1635 = vsyncadd [#allocation3], %s1634
      %s1636 = sshll.u32 [#allocation2], 4
      %s1637 = int_to_ptr.vmem [resolvable:$true] %s1636
      %1642 = dma.vmem_to_hbm [thread:$0]  %s1637, 16384, %s2, [#allocation3], 128, 128, 8
    $region13: #{tpu_custom_call.1} parent=1 // pred_fallthru
      _
    // Predicated region
    $region14: #{tpu_custom_call.1} parent=1 // pred_check
      _
    $region15: #{tpu_custom_call.1} parent=1 // pred_check_branch
      %1644 = sbr.rel (0) target = $region17
    $region16: #{tpu_custom_call.1} parent=1 // pred_region
      %1645 = dma.done [#allocation3], 16384
    $region17: #{tpu_custom_call.1} parent=1 // pred_fallthru
      _
    %1646 = vsyncpa [#allocation3], 1

</llo_original>
